<compile_context>
chip_gen: v6e
topology: v6e:2x2x1
jax: 0.10.0
libtpu: 0.0.40
codegen_flags: <defaults>
</compile_context>

<pallas_src>
import jax
import jax.numpy as jnp
from jax.experimental import pallas as pl
from jax.experimental.pallas import tpu as pltpu


LANES = 128   # every feature dim is zero-padded to one 128-lane tile

# ---- packed-parameter slab layout ------------------------------------------
# 13 weight tiles, each zero-padded to (LANES, LANES) and stored in bf16.
# GRU input->hidden weights keep their natural packed gate layout along the
# output lanes: cols [R | Z | N] = [0,2H) | [2H,4H) | [4H,6H).  Recurrent (hh)
# weights are not stored: h == 0 on this step, so W_hh @ h == 0.
_W_NAMES = (
    "PW1", "PW2", "LD_W", "OUT_W",
    "SC_CTX", "SC_ATT", "SC_STY",
    "ATT_PRE", "ATT_STY",
    "D1_CTX", "D1_ATT", "D1_STY",
    "D2",
)
_WIDX = {n: i for i, n in enumerate(_W_NAMES)}

# Bias slab rows (f32, tiny).  *_BG packs [b_ir+b_hr | b_iz+b_hz | b_in] along
# the same 6H lanes as the gate matmul output; *_BHN holds b_hn at lanes [0,2H)
# (aligned with the rolled n pre-activation).
_B_NAMES = (
    "PB1", "PB2", "LD_B", "OUT_B", "SC_B", "AT_W",
    "ATT_BG", "ATT_BHN", "D1_BG", "D1_BHN", "D2_BG", "D2_BHN",
)
_BIDX = {n: i for i, n in enumerate(_B_NAMES)}


def _make_kernel(H):
    H2 = 2 * H

    def kernel(enc_ref, attw_ref, dec_ref, style_ref, len_ref, w_ref, b_ref,
               out_ref, ctx_ref):
        """One batch block of the fused AttnDecoderRNN forward."""
        f32 = jnp.float32
        bf16 = jnp.bfloat16

        def dotb(x, name):                       # bf16 MXU matmul, f32 accumulate
            return jnp.dot(x.astype(bf16), w_ref[_WIDX[name]],
                           preferred_element_type=f32)

        def bias(name):                          # (1, LANES) f32 row
            return b_ref[pl.ds(_BIDX[name], 1), :]

        lane = jax.lax.broadcasted_iota(jnp.int32, (1, LANES), 1)
        hid_mask = (lane < H2).astype(f32)       # valid GRU-hidden lanes [0, 2H)

        def gru_zero_h(segments, tag):
            # PyTorch GRU cell specialised to h == 0 (first decoder step):
            #   r  = sigmoid(sum_s x_s W_r^s + b_ir + b_hr)
            #   z  = sigmoid(sum_s x_s W_z^s + b_iz + b_hz)
            #   n  = tanh   (sum_s x_s W_n^s + b_in + r * b_hn)
            #   h' = (1 - z) * n                      (the z*h term vanishes)
            # Gate columns stay packed [R|Z|N] in one tile per segment; Z / N
            # pre-activations are realigned to lane 0 with XLU rolls.
            g = None
            for x, name in segments:
                t = dotb(x, name)
                g = t if g is None else g + t
            gb = g + bias(tag + "_BG")                               # (nb, LANES)
            r = jax.nn.sigmoid(gb)                                   # r @ lanes [0,2H)
            z = jax.nn.sigmoid(pltpu.roll(gb, LANES - H2, axis=1))   # z -> lanes [0,2H)
            n = jnp.tanh(pltpu.roll(gb, LANES - 2 * H2, axis=1)      # n -> lanes [0,2H)
                         + r * bias(tag + "_BHN"))
            return (1.0 - z) * n * hid_mask      # exact h' at [0,2H), 0 elsewhere

        dec = dec_ref[...]                       # (nb, LANES) bf16
        style = style_ref[...]                   # (nb, LANES) bf16

        # ---- prenet: Linear->ReLU->(Dropout=id)->Linear->ReLU->(Dropout=id) ----
        h1 = jnp.maximum(dotb(dec, "PW1") + bias("PB1"), 0.0)
        pre = jnp.maximum(dotb(h1, "PW2") + bias("PB2"), 0.0)

        # ---- attention GRU (zero hidden; zero input_context segment dropped) ----
        h_att = gru_zero_h([(pre, "ATT_PRE"), (style, "ATT_STY")], "ATT")
        h_att_b = h_att.astype(bf16)

        # ---- additive attention, lane-dense (nb, T) score layout ----
        ad = dotb(h_att_b, "LD_W") + bias("LD_B")                    # (nb, LANES)
        e = jnp.tanh(attw_ref[...].astype(f32) + ad[:, None, :])     # (nb, T, LANES)
        atw = bias("AT_W").reshape(1, 1, LANES)
        scores = jnp.sum(e * atw, axis=-1)                           # (nb, T)
        # scalar attn bias omitted: constant offsets cancel under L1 normalization
        t_iota = jax.lax.broadcasted_iota(jnp.int32, scores.shape, 1)
        valid = t_iota < len_ref[...]                                # (nb, T) bool
        s = jnp.where(valid, scores, jnp.float32(-1e30))
        m = jnp.max(s, axis=-1, keepdims=True)                       # stable exp
        u = jnp.exp(s - m) * valid.astype(f32)                       # masked, unnorm.
        denom = jnp.maximum(jnp.sum(u, axis=-1, keepdims=True), 1e-12)
        w_att = u / denom                 # == F.normalize(exp(score), p=1, dim=time)

        ctx = jnp.sum(w_att[:, :, None] * enc_ref[...].astype(f32), axis=1)
        ctx_ref[...] = ctx
        ctx_b = ctx.astype(bf16)

        # ---- decoder stack with short-cut residuals (all GRU hiddens zero) ----
        residual = (dotb(ctx_b, "SC_CTX") + dotb(h_att_b, "SC_ATT")
                    + dotb(style, "SC_STY") + bias("SC_B"))
        residual = residual + gru_zero_h(
            [(ctx_b, "D1_CTX"), (h_att_b, "D1_ATT"), (style, "D1_STY")], "D1")
        residual = residual + gru_zero_h([(residual, "D2")], "D2")
        out_ref[...] = dotb(residual, "OUT_W") + bias("OUT_B")

    return kernel


def init_params(key, H, O, S, r):
    """Deterministic synthetic parameters in x @ W orientation (PyTorch shapes)."""
    dims = {
        "pw1": (O, 2 * H), "pb1": (1, 2 * H),
        "pw2": (2 * H, H), "pb2": (1, H),
        "ga_wih": (3 * H + S, 6 * H), "ga_whh": (2 * H, 6 * H),
        "ga_bih": (1, 6 * H), "ga_bhh": (1, 6 * H),
        "ld_w": (2 * H, 2 * H), "ld_b": (1, 2 * H),
        "at_w": (1, 2 * H), "at_b": (1, 1),
        "sc_w": (4 * H + S, 2 * H), "sc_b": (1, 2 * H),
        "g1_wih": (4 * H + S, 6 * H), "g1_whh": (2 * H, 6 * H),
        "g1_bih": (1, 6 * H), "g1_bhh": (1, 6 * H),
        "g2_wih": (2 * H, 6 * H), "g2_whh": (2 * H, 6 * H),
        "g2_bih": (1, 6 * H), "g2_bhh": (1, 6 * H),
        "out_w": (2 * H, r * O), "out_b": (1, r * O),
    }
    keys = jax.random.split(key, len(dims))
    return {name: 0.1 * jax.random.normal(k, shape, jnp.float32)
            for (name, shape), k in zip(dims.items(), keys)}


def pack_params(p, *, H, O, S, r, lanes=LANES):
    """Split / fold / zero-pad the parameters into two contiguous VMEM slabs."""
    H2 = 2 * H
    assert max(O, H, H2, S, 6 * H, 3 * H + S, 4 * H + S, r * O) <= lanes, \
        "this packing assumes every feature dim (incl. 6H gate lanes) fits one 128-lane tile"

    def padw(m):
        m = jnp.asarray(m, jnp.float32)
        return jnp.pad(m, ((0, lanes - m.shape[0]), (0, lanes - m.shape[1])))

    def padb(v):
        v = jnp.asarray(v, jnp.float32).reshape(-1)
        return jnp.pad(v, (0, lanes - v.shape[0]))

    # GRU W_ih matrices keep their natural [R | Z | N] column packing; only the
    # input rows are split per segment (the zero input_context rows are dropped).
    w = {"PW1": p["pw1"], "PW2": p["pw2"], "LD_W": p["ld_w"], "OUT_W": p["out_w"],
         # short_cut input rows: [ctx (2H), h_att (2H), style (S)]
         "SC_CTX": p["sc_w"][:H2], "SC_ATT": p["sc_w"][H2:2 * H2],
         "SC_STY": p["sc_w"][2 * H2:],
         # gru_att input rows: [prenet (H), zero context (2H) -> dropped, style (S)]
         "ATT_PRE": p["ga_wih"][:H], "ATT_STY": p["ga_wih"][3 * H:],
         # gru_dec1 input rows: [ctx (2H), h_att (2H), style (S)]
         "D1_CTX": p["g1_wih"][:H2], "D1_ATT": p["g1_wih"][H2:2 * H2],
         "D1_STY": p["g1_wih"][2 * H2:],
         "D2": p["g2_wih"]}
    w_slab = jnp.stack([padw(w[n]) for n in _W_NAMES]).astype(jnp.bfloat16)

    b = {"PB1": p["pb1"], "PB2": p["pb2"], "LD_B": p["ld_b"],
         "OUT_B": p["out_b"], "SC_B": p["sc_b"], "AT_W": p["at_w"]}
    # NOTE: p["at_b"] (scalar attn bias) is intentionally not packed: a constant
    # score offset cancels exactly under F.normalize(p=1, dim=1).
    for tag, bi, bh in (("ATT", p["ga_bih"], p["ga_bhh"]),
                        ("D1", p["g1_bih"], p["g1_bhh"]),
                        ("D2", p["g2_bih"], p["g2_bhh"])):
        bi = jnp.asarray(bi, jnp.float32).reshape(-1)
        bh = jnp.asarray(bh, jnp.float32).reshape(-1)
        b[tag + "_BG"] = jnp.concatenate(            # folded r/z biases (h == 0)
            [bi[:H2] + bh[:H2], bi[H2:2 * H2] + bh[H2:2 * H2], bi[2 * H2:]])
        b[tag + "_BHN"] = bh[2 * H2:]                # n = tanh(. + b_in + r*b_hn)
    rows = [padb(b[n]) for n in _B_NAMES]
    while len(rows) % 8:                             # pad sublane count
        rows.append(jnp.zeros((lanes,), jnp.float32))
    b_slab = jnp.stack(rows)                         # f32: tiny, keeps gate math exact
    return w_slab, b_slab


def attn_decoder_forward(w_slab, b_slab, input_enc, input_attW_enc, input_dec,
                         style_vec, lengths_enc, *, H, O, S, r, block_rows=128):
    N, T, _ = input_enc.shape
    H2 = 2 * H
    NP0 = pl.cdiv(N, 16) * 16          # batch padded to 16 (bf16 sublane packing)
    nb = min(block_rows, NP0)          # batch rows per grid step (large => MXU util)
    NP = pl.cdiv(NP0, nb) * nb
    Tp = pl.cdiv(T, 16) * 16           # time padded to 16 (bf16 sublane packing)

    def pad3(x):
        x = jnp.asarray(x, jnp.float32)
        return jnp.pad(x, ((0, NP - N), (0, Tp - T),
                           (0, LANES - x.shape[2]))).astype(jnp.bfloat16)

    def pad2(x):
        x = jnp.asarray(x, jnp.float32).reshape(N, -1)
        return jnp.pad(x, ((0, NP - N), (0, LANES - x.shape[1]))).astype(jnp.bfloat16)

    enc_p = pad3(input_enc)
    attw_p = pad3(input_attW_enc)
    dec_p = pad2(input_dec)
    sty_p = pad2(style_vec.reshape(N, -1))
    # Only a (N, 1) int32 lengths column goes to HBM; the (N, T) mask is rebuilt
    # in-kernel (replaces pack_padded_sequence / PackedSequence bookkeeping).
    # Padded batch rows get length 0 -> fully masked -> ctx = 0.
    len_p = jnp.pad(jnp.asarray(lengths_enc, jnp.int32).reshape(N, 1),
                    ((0, NP - N), (0, 0)))

    n_w = len(_W_NAMES)
    flops = 2 * NP * LANES * LANES * n_w + 6 * NP * Tp * LANES
    transc = NP * Tp * LANES + NP * Tp + 6 * NP * LANES
    bytes_acc = (enc_p.nbytes + attw_p.nbytes + dec_p.nbytes + sty_p.nbytes
                 + len_p.nbytes + w_slab.nbytes + b_slab.nbytes
                 + 2 * NP * LANES * 4)

    # NOTE: the weight / bias slabs use a constant index_map, so they are DMA'd
    # only once; they could additionally be single-buffered (or staged into
    # scratch with one manual make_async_copy) to halve their ~0.9 MB VMEM
    # footprint once NB / T are scaled up.
    out_p, ctx_p = pl.pallas_call(
        _make_kernel(H),
        grid=(NP // nb,),
        in_specs=[
            pl.BlockSpec((nb, Tp, LANES), lambda i: (i, 0, 0)),    # input_enc (bf16)
            pl.BlockSpec((nb, Tp, LANES), lambda i: (i, 0, 0)),    # input_attW_enc (bf16)
            pl.BlockSpec((nb, LANES), lambda i: (i, 0)),           # input_dec (bf16)
            pl.BlockSpec((nb, LANES), lambda i: (i, 0)),           # style (bf16)
            pl.BlockSpec((nb, 1), lambda i: (i, 0)),               # lengths (int32)
            pl.BlockSpec(w_slab.shape, lambda i: (0, 0, 0)),       # weight slab (resident)
            pl.BlockSpec(b_slab.shape, lambda i: (0, 0)),          # bias slab (resident)
        ],
        out_specs=(pl.BlockSpec((nb, LANES), lambda i: (i, 0)),    # output (lane-dense)
                   pl.BlockSpec((nb, LANES), lambda i: (i, 0))),   # context (lane-dense)
        out_shape=(jax.ShapeDtypeStruct((NP, LANES), jnp.float32),
                   jax.ShapeDtypeStruct((NP, LANES), jnp.float32)),
        compiler_params=pltpu.CompilerParams(
            dimension_semantics=("parallel",)),      # shard batch across TCs (v7x)
        cost_estimate=pl.CostEstimate(flops=int(flops),
                                      transcendentals=int(transc),
                                      bytes_accessed=int(bytes_acc)),
    )(enc_p, attw_p, dec_p, sty_p, len_p, w_slab, b_slab)

    output = out_p[:N, :r * O].reshape(N, r, O)          # matches .view(N, r, -1)
    attn_applied = ctx_p[:N, :H2].reshape(N, 1, H2)      # matches bmm result (N,1,2H)
    return output, attn_applied


def reference_forward(p, input_enc, input_attW_enc, input_dec, style_vec,
                      lengths_enc, *, H, O, S, r):
    """Pure-JAX f32 reference of the PyTorch forward (eval mode, zero hidden states)."""
    hp = jax.lax.Precision.HIGHEST
    dot = lambda a, b: jnp.dot(a, b, precision=hp)
    N, T, _ = input_enc.shape
    style = style_vec.reshape(N, S)
    h1 = jnp.maximum(dot(input_dec, p["pw1"]) + p["pb1"], 0.0)
    pre = jnp.maximum(dot(h1, p["pw2"]) + p["pb2"], 0.0)

    def gru(x, wih, whh, bih, bhh):
        h = jnp.zeros((N, 2 * H), jnp.float32)
        gi = dot(x, wih) + bih
        gh = dot(h, whh) + bhh
        i_r, i_z, i_n = jnp.split(gi, 3, axis=1)
        h_r, h_z, h_n = jnp.split(gh, 3, axis=1)
        rg = jax.nn.sigmoid(i_r + h_r)
        zg = jax.nn.sigmoid(i_z + h_z)
        ng = jnp.tanh(i_n + rg * h_n)
        return (1.0 - zg) * ng + zg * h

    in_att = jnp.concatenate([pre, jnp.zeros((N, 2 * H), jnp.float32), style], axis=1)
    h_att = gru(in_att, p["ga_wih"], p["ga_whh"], p["ga_bih"], p["ga_bhh"])
    ad = dot(h_att, p["ld_w"]) + p["ld_b"]
    e = jnp.tanh(input_attW_enc + ad[:, None, :])
    scores = (jnp.sum(e * p["at_w"].reshape(1, 1, -1), axis=-1, keepdims=True)
              + p["at_b"].reshape(1, 1, 1))
    mask = (jnp.arange(T)[None, :, None] < lengths_enc[:, None, None]).astype(jnp.float32)
    wgt = jnp.exp(scores) * mask
    wgt = wgt / jnp.maximum(jnp.sum(jnp.abs(wgt), axis=1, keepdims=True), 1e-12)
    ctx = jnp.sum(wgt * input_enc, axis=1)
    cat = jnp.concatenate([ctx, h_att, style], axis=1)
    residual = dot(cat, p["sc_w"]) + p["sc_b"]
    residual = residual + gru(cat, p["g1_wih"], p["g1_whh"], p["g1_bih"], p["g1_bhh"])
    residual = residual + gru(residual, p["g2_wih"], p["g2_whh"], p["g2_bih"], p["g2_bhh"])
    out = dot(residual, p["out_w"]) + p["out_b"]
    return out.reshape(N, r, O), ctx.reshape(N, 1, 2 * H)


if __name__ == "__main__":
    H, O, S, r = 16, 8, 8, 2      # hidden_size, output_size, style_embed_size, r_factor
    N, T = 16, 8                  # batch, encoder time steps

    key = jax.random.PRNGKey(0)
    k_enc, k_attw, k_dec, k_style, k_par = jax.random.split(key, 5)
    input_enc = 0.5 * jax.random.normal(k_enc, (N, T, 2 * H), jnp.float32)
    input_attW_enc = 0.5 * jax.random.normal(k_attw, (N, T, 2 * H), jnp.float32)
    input_dec = jax.random.normal(k_dec, (N, O), jnp.float32)
    style_vec = jax.random.normal(k_style, (N, 1, S), jnp.float32)
    # sorted-descending valid lengths (pack_padded_sequence precondition)
    lengths_enc = jnp.maximum(T - (jnp.arange(N, dtype=jnp.int32) // 2), 1)

    params = init_params(k_par, H, O, S, r)
    w_slab, b_slab = pack_params(params, H=H, O=O, S=S, r=r)

    output, attn_applied = attn_decoder_forward(
        w_slab, b_slab, input_enc, input_attW_enc, input_dec, style_vec,
        lengths_enc, H=H, O=O, S=S, r=r)
    jax.block_until_ready((output, attn_applied))

    assert output.shape == (N, r, O)
    assert attn_applied.shape == (N, 1, 2 * H)

    # correctness check against a pure-JAX f32 reference of the PyTorch forward
    ref_out, ref_ctx = reference_forward(
        params, input_enc, input_attW_enc, input_dec, style_vec, lengths_enc,
        H=H, O=O, S=S, r=r)
    err = max(float(jnp.max(jnp.abs(output - ref_out))),
              float(jnp.max(jnp.abs(attn_applied - ref_ctx))))
    # bf16 weights/activations with f32 accumulation -> ~1e-2-scale abs error
    # against the f32 reference (an all-f32 build of this kernel matches ~1e-4).
    assert err < 5e-2, f"mismatch vs reference: {err}"
    print("KERNEL_OK")
</pallas_src>

<mosaic_0001>
module attributes {stable_mosaic.version = 11 : i64} {
  func.func @kernel(%arg0: i32, %arg1: memref<16x16x128xbf16, #tpu.memory_space<vmem>>, %arg2: memref<16x16x128xbf16, #tpu.memory_space<vmem>>, %arg3: memref<16x128xbf16, #tpu.memory_space<vmem>>, %arg4: memref<16x128xbf16, #tpu.memory_space<vmem>>, %arg5: memref<16x1xi32, #tpu.memory_space<vmem>>, %arg6: memref<13x128x128xbf16, #tpu.memory_space<vmem>>, %arg7: memref<16x128xf32, #tpu.memory_space<vmem>>, %arg8: memref<16x128xf32, #tpu.memory_space<vmem>>, %arg9: memref<16x128xf32, #tpu.memory_space<vmem>>) attributes {dimension_semantics = [#tpu.dimension_semantics<parallel>], iteration_bounds = array<i64: 1>, scalar_prefetch = 0 : i64, scratch_operands = 0 : i64, tpu.core_type = #tpu.core_type<tc>, window_params = [{transform_indices = @transform_0, window_bounds = array<i64: 16, 16, 128>}, {transform_indices = @transform_1, window_bounds = array<i64: 16, 16, 128>}, {transform_indices = @transform_2, window_bounds = array<i64: 16, 128>}, {transform_indices = @transform_3, window_bounds = array<i64: 16, 128>}, {transform_indices = @transform_4, window_bounds = array<i64: 16, 1>}, {pipeline_mode = #tpu.pipeline_mode<synchronous>, transform_indices = @transform_5, window_bounds = array<i64: 13, 128, 128>}, {pipeline_mode = #tpu.pipeline_mode<synchronous>, transform_indices = @transform_6, window_bounds = array<i64: 16, 128>}, {transform_indices = @transform_7, window_bounds = array<i64: 16, 128>}, {transform_indices = @transform_8, window_bounds = array<i64: 16, 128>}]} {
    %0 = tpu.iota {dimensions = array<i32: 1>} : vector<1x128xi32>
    %c32_i32 = arith.constant 32 : i32
    %1 = vector.broadcast %c32_i32 : i32 to vector<1x128xi32>
    %2 = arith.cmpi slt, %0, %1 : vector<1x128xi32>
    %3 = arith.extui %2 : vector<1x128xi1> to vector<1x128xi32>
    %4 = arith.sitofp %3 : vector<1x128xi32> to vector<1x128xf32>
    %c0 = arith.constant 0 : index
    %c0_0 = arith.constant 0 : index
    %5 = vector.load %arg3[%c0, %c0_0] : memref<16x128xbf16, #tpu.memory_space<vmem>>, vector<16x128xbf16>
    %c0_1 = arith.constant 0 : index
    %c0_2 = arith.constant 0 : index
    %6 = vector.load %arg4[%c0_1, %c0_2] : memref<16x128xbf16, #tpu.memory_space<vmem>>, vector<16x128xbf16>
    %c0_3 = arith.constant 0 : index
    %c0_4 = arith.constant 0 : index
    %c0_5 = arith.constant 0 : index
    %7 = vector.load %arg6[%c0_3, %c0_4, %c0_5] : memref<13x128x128xbf16, #tpu.memory_space<vmem>>, vector<1x128x128xbf16>
    %8 = vector.shape_cast %7 : vector<1x128x128xbf16> to vector<128x128xbf16>
    %cst = arith.constant dense<0.000000e+00> : vector<16x128xf32>
    %9 = tpu.matmul %5, %8, %cst {dimension_numbers = #tpu.dot_dimension_numbers<[1], [0], [0], [1], [0, 0, 1, 1], [], []>} : vector<16x128xbf16>, vector<128x128xbf16>, vector<16x128xf32> -> vector<16x128xf32>
    %c0_6 = arith.constant 0 : index
    %c0_7 = arith.constant 0 : index
    %10 = vector.load %arg7[%c0_6, %c0_7] : memref<16x128xf32, #tpu.memory_space<vmem>>, vector<1x128xf32>
    %11 = vector.broadcast %10 : vector<1x128xf32> to vector<16x128xf32>
    %12 = arith.addf %9, %11 : vector<16x128xf32>
    %cst_8 = arith.constant 0.000000e+00 : f32
    %13 = vector.broadcast %cst_8 : f32 to vector<16x128xf32>
    %14 = arith.maximumf %12, %13 : vector<16x128xf32>
    %15 = arith.truncf %14 : vector<16x128xf32> to vector<16x128xbf16>
    %c1 = arith.constant 1 : index
    %c0_9 = arith.constant 0 : index
    %c0_10 = arith.constant 0 : index
    %16 = vector.load %arg6[%c1, %c0_9, %c0_10] : memref<13x128x128xbf16, #tpu.memory_space<vmem>>, vector<1x128x128xbf16>
    %17 = vector.shape_cast %16 : vector<1x128x128xbf16> to vector<128x128xbf16>
    %cst_11 = arith.constant dense<0.000000e+00> : vector<16x128xf32>
    %18 = tpu.matmul %15, %17, %cst_11 {dimension_numbers = #tpu.dot_dimension_numbers<[1], [0], [0], [1], [0, 0, 1, 1], [], []>} : vector<16x128xbf16>, vector<128x128xbf16>, vector<16x128xf32> -> vector<16x128xf32>
    %c1_12 = arith.constant 1 : index
    %c0_13 = arith.constant 0 : index
    %19 = vector.load %arg7[%c1_12, %c0_13] : memref<16x128xf32, #tpu.memory_space<vmem>>, vector<1x128xf32>
    %20 = vector.broadcast %19 : vector<1x128xf32> to vector<16x128xf32>
    %21 = arith.addf %18, %20 : vector<16x128xf32>
    %cst_14 = arith.constant 0.000000e+00 : f32
    %22 = vector.broadcast %cst_14 : f32 to vector<16x128xf32>
    %23 = arith.maximumf %21, %22 : vector<16x128xf32>
    %24 = arith.truncf %23 : vector<16x128xf32> to vector<16x128xbf16>
    %c7 = arith.constant 7 : index
    %c0_15 = arith.constant 0 : index
    %c0_16 = arith.constant 0 : index
    %25 = vector.load %arg6[%c7, %c0_15, %c0_16] : memref<13x128x128xbf16, #tpu.memory_space<vmem>>, vector<1x128x128xbf16>
    %26 = vector.shape_cast %25 : vector<1x128x128xbf16> to vector<128x128xbf16>
    %cst_17 = arith.constant dense<0.000000e+00> : vector<16x128xf32>
    %27 = tpu.matmul %24, %26, %cst_17 {dimension_numbers = #tpu.dot_dimension_numbers<[1], [0], [0], [1], [0, 0, 1, 1], [], []>} : vector<16x128xbf16>, vector<128x128xbf16>, vector<16x128xf32> -> vector<16x128xf32>
    %c8 = arith.constant 8 : index
    %c0_18 = arith.constant 0 : index
    %c0_19 = arith.constant 0 : index
    %28 = vector.load %arg6[%c8, %c0_18, %c0_19] : memref<13x128x128xbf16, #tpu.memory_space<vmem>>, vector<1x128x128xbf16>
    %29 = vector.shape_cast %28 : vector<1x128x128xbf16> to vector<128x128xbf16>
    %cst_20 = arith.constant dense<0.000000e+00> : vector<16x128xf32>
    %30 = tpu.matmul %6, %29, %cst_20 {dimension_numbers = #tpu.dot_dimension_numbers<[1], [0], [0], [1], [0, 0, 1, 1], [], []>} : vector<16x128xbf16>, vector<128x128xbf16>, vector<16x128xf32> -> vector<16x128xf32>
    %31 = arith.addf %27, %30 : vector<16x128xf32>
    %c6 = arith.constant 6 : index
    %c0_21 = arith.constant 0 : index
    %32 = vector.load %arg7[%c6, %c0_21] : memref<16x128xf32, #tpu.memory_space<vmem>>, vector<1x128xf32>
    %33 = vector.broadcast %32 : vector<1x128xf32> to vector<16x128xf32>
    %34 = arith.addf %31, %33 : vector<16x128xf32>
    %35 = arith.negf %34 : vector<16x128xf32>
    %36 = math.exp %35 : vector<16x128xf32>
    %cst_22 = arith.constant 1.000000e+00 : f32
    %37 = vector.broadcast %cst_22 : f32 to vector<16x128xf32>
    %38 = arith.addf %37, %36 : vector<16x128xf32>
    %39 = arith.divf %37, %38 : vector<16x128xf32>
    %c96_i32 = arith.constant 96 : i32
    %40 = tpu.dynamic_rotate %34 by %c96_i32 dim 1 : vector<16x128xf32>, i32 -> vector<16x128xf32>
    %41 = arith.negf %40 : vector<16x128xf32>
    %42 = math.exp %41 : vector<16x128xf32>
    %cst_23 = arith.constant 1.000000e+00 : f32
    %43 = vector.broadcast %cst_23 : f32 to vector<16x128xf32>
    %44 = arith.addf %43, %42 : vector<16x128xf32>
    %45 = arith.divf %43, %44 : vector<16x128xf32>
    %c64_i32 = arith.constant 64 : i32
    %46 = tpu.dynamic_rotate %34 by %c64_i32 dim 1 : vector<16x128xf32>, i32 -> vector<16x128xf32>
    %c7_24 = arith.constant 7 : index
    %c0_25 = arith.constant 0 : index
    %47 = vector.load %arg7[%c7_24, %c0_25] : memref<16x128xf32, #tpu.memory_space<vmem>>, vector<1x128xf32>
    %48 = vector.broadcast %47 : vector<1x128xf32> to vector<16x128xf32>
    %49 = arith.mulf %39, %48 : vector<16x128xf32>
    %50 = arith.addf %46, %49 : vector<16x128xf32>
    %51 = math.tanh %50 : vector<16x128xf32>
    %cst_26 = arith.constant 1.000000e+00 : f32
    %52 = vector.broadcast %cst_26 : f32 to vector<16x128xf32>
    %53 = arith.subf %52, %45 : vector<16x128xf32>
    %54 = arith.mulf %53, %51 : vector<16x128xf32>
    %55 = vector.broadcast %4 : vector<1x128xf32> to vector<16x128xf32>
    %56 = arith.mulf %54, %55 : vector<16x128xf32>
    %57 = arith.truncf %56 : vector<16x128xf32> to vector<16x128xbf16>
    %c2 = arith.constant 2 : index
    %c0_27 = arith.constant 0 : index
    %c0_28 = arith.constant 0 : index
    %58 = vector.load %arg6[%c2, %c0_27, %c0_28] : memref<13x128x128xbf16, #tpu.memory_space<vmem>>, vector<1x128x128xbf16>
    %59 = vector.shape_cast %58 : vector<1x128x128xbf16> to vector<128x128xbf16>
    %cst_29 = arith.constant dense<0.000000e+00> : vector<16x128xf32>
    %60 = tpu.matmul %57, %59, %cst_29 {dimension_numbers = #tpu.dot_dimension_numbers<[1], [0], [0], [1], [0, 0, 1, 1], [], []>} : vector<16x128xbf16>, vector<128x128xbf16>, vector<16x128xf32> -> vector<16x128xf32>
    %c2_30 = arith.constant 2 : index
    %c0_31 = arith.constant 0 : index
    %61 = vector.load %arg7[%c2_30, %c0_31] : memref<16x128xf32, #tpu.memory_space<vmem>>, vector<1x128xf32>
    %62 = vector.broadcast %61 : vector<1x128xf32> to vector<16x128xf32>
    %63 = arith.addf %60, %62 : vector<16x128xf32>
    %c0_32 = arith.constant 0 : index
    %c0_33 = arith.constant 0 : index
    %c0_34 = arith.constant 0 : index
    %64 = vector.load %arg2[%c0_32, %c0_33, %c0_34] : memref<16x16x128xbf16, #tpu.memory_space<vmem>>, vector<16x16x128xbf16>
    %65 = arith.extf %64 : vector<16x16x128xbf16> to vector<16x16x128xf32>
    %66 = vector.shape_cast %63 : vector<16x128xf32> to vector<16x1x128xf32>
    %67 = vector.broadcast %66 : vector<16x1x128xf32> to vector<16x16x128xf32>
    %68 = arith.addf %65, %67 : vector<16x16x128xf32>
    %69 = math.tanh %68 : vector<16x16x128xf32>
    %c5 = arith.constant 5 : index
    %c0_35 = arith.constant 0 : index
    %70 = vector.load %arg7[%c5, %c0_35] : memref<16x128xf32, #tpu.memory_space<vmem>>, vector<1x128xf32>
    %71 = vector.shape_cast %70 : vector<1x128xf32> to vector<1x1x128xf32>
    %72 = vector.broadcast %71 : vector<1x1x128xf32> to vector<16x16x128xf32>
    %73 = arith.mulf %69, %72 : vector<16x16x128xf32>
    %cst_36 = arith.constant dense<0.000000e+00> : vector<16x16xf32>
    %74 = vector.multi_reduction <add>, %73, %cst_36 [2] : vector<16x16x128xf32> to vector<16x16xf32>
    %75 = tpu.iota {dimensions = array<i32: 1>} : vector<16x16xi32>
    %c0_37 = arith.constant 0 : index
    %c0_38 = arith.constant 0 : index
    %76 = vector.load %arg5[%c0_37, %c0_38] : memref<16x1xi32, #tpu.memory_space<vmem>>, vector<16x1xi32>
    %77 = vector.broadcast %76 : vector<16x1xi32> to vector<16x16xi32>
    %78 = arith.cmpi slt, %75, %77 : vector<16x16xi32>
    %cst_39 = arith.constant -1.000000e+30 : f32
    %79 = vector.broadcast %cst_39 : f32 to vector<16x16xf32>
    %80 = arith.select %78, %74, %79 : vector<16x16xi1>, vector<16x16xf32>
    %cst_40 = arith.constant dense<0xFF800000> : vector<16xf32>
    %81 = vector.multi_reduction <maximumf>, %80, %cst_40 [1] : vector<16x16xf32> to vector<16xf32>
    %82 = vector.shape_cast %81 : vector<16xf32> to vector<16x1xf32>
    %83 = vector.broadcast %82 : vector<16x1xf32> to vector<16x16xf32>
    %84 = arith.subf %80, %83 : vector<16x16xf32>
    %85 = math.exp %84 : vector<16x16xf32>
    %86 = arith.extui %78 : vector<16x16xi1> to vector<16x16xi32>
    %87 = arith.sitofp %86 : vector<16x16xi32> to vector<16x16xf32>
    %88 = arith.mulf %85, %87 : vector<16x16xf32>
    %cst_41 = arith.constant dense<0.000000e+00> : vector<16xf32>
    %89 = vector.multi_reduction <add>, %88, %cst_41 [1] : vector<16x16xf32> to vector<16xf32>
    %90 = vector.shape_cast %89 : vector<16xf32> to vector<16x1xf32>
    %cst_42 = arith.constant 9.99999996E-13 : f32
    %91 = vector.broadcast %cst_42 : f32 to vector<16x1xf32>
    %92 = arith.maximumf %90, %91 : vector<16x1xf32>
    %93 = vector.broadcast %92 : vector<16x1xf32> to vector<16x16xf32>
    %94 = arith.divf %88, %93 : vector<16x16xf32>
    %95 = vector.shape_cast %94 : vector<16x16xf32> to vector<16x16x1xf32>
    %c0_43 = arith.constant 0 : index
    %c0_44 = arith.constant 0 : index
    %c0_45 = arith.constant 0 : index
    %96 = vector.load %arg1[%c0_43, %c0_44, %c0_45] : memref<16x16x128xbf16, #tpu.memory_space<vmem>>, vector<16x16x128xbf16>
    %97 = arith.extf %96 : vector<16x16x128xbf16> to vector<16x16x128xf32>
    %98 = vector.broadcast %95 : vector<16x16x1xf32> to vector<16x16x128xf32>
    %99 = arith.mulf %98, %97 : vector<16x16x128xf32>
    %cst_46 = arith.constant dense<0.000000e+00> : vector<16x128xf32>
    %100 = vector.multi_reduction <add>, %99, %cst_46 [1] : vector<16x16x128xf32> to vector<16x128xf32>
    %c0_47 = arith.constant 0 : index
    %c0_48 = arith.constant 0 : index
    %101 = vector.load %arg9[%c0_47, %c0_48] : memref<16x128xf32, #tpu.memory_space<vmem>>, vector<16x128xf32>
    tpu.vector_store %arg9[%c0_47, %c0_48], %100 {strides = array<i32>} : memref<16x128xf32, #tpu.memory_space<vmem>>, vector<16x128xf32>,
    %102 = arith.truncf %100 : vector<16x128xf32> to vector<16x128xbf16>
    %c4 = arith.constant 4 : index
    %c0_49 = arith.constant 0 : index
    %c0_50 = arith.constant 0 : index
    %103 = vector.load %arg6[%c4, %c0_49, %c0_50] : memref<13x128x128xbf16, #tpu.memory_space<vmem>>, vector<1x128x128xbf16>
    %104 = vector.shape_cast %103 : vector<1x128x128xbf16> to vector<128x128xbf16>
    %cst_51 = arith.constant dense<0.000000e+00> : vector<16x128xf32>
    %105 = tpu.matmul %102, %104, %cst_51 {dimension_numbers = #tpu.dot_dimension_numbers<[1], [0], [0], [1], [0, 0, 1, 1], [], []>} : vector<16x128xbf16>, vector<128x128xbf16>, vector<16x128xf32> -> vector<16x128xf32>
    %c5_52 = arith.constant 5 : index
    %c0_53 = arith.constant 0 : index
    %c0_54 = arith.constant 0 : index
    %106 = vector.load %arg6[%c5_52, %c0_53, %c0_54] : memref<13x128x128xbf16, #tpu.memory_space<vmem>>, vector<1x128x128xbf16>
    %107 = vector.shape_cast %106 : vector<1x128x128xbf16> to vector<128x128xbf16>
    %cst_55 = arith.constant dense<0.000000e+00> : vector<16x128xf32>
    %108 = tpu.matmul %57, %107, %cst_55 {dimension_numbers = #tpu.dot_dimension_numbers<[1], [0], [0], [1], [0, 0, 1, 1], [], []>} : vector<16x128xbf16>, vector<128x128xbf16>, vector<16x128xf32> -> vector<16x128xf32>
    %109 = arith.addf %105, %108 : vector<16x128xf32>
    %c6_56 = arith.constant 6 : index
    %c0_57 = arith.constant 0 : index
    %c0_58 = arith.constant 0 : index
    %110 = vector.load %arg6[%c6_56, %c0_57, %c0_58] : memref<13x128x128xbf16, #tpu.memory_space<vmem>>, vector<1x128x128xbf16>
    %111 = vector.shape_cast %110 : vector<1x128x128xbf16> to vector<128x128xbf16>
    %cst_59 = arith.constant dense<0.000000e+00> : vector<16x128xf32>
    %112 = tpu.matmul %6, %111, %cst_59 {dimension_numbers = #tpu.dot_dimension_numbers<[1], [0], [0], [1], [0, 0, 1, 1], [], []>} : vector<16x128xbf16>, vector<128x128xbf16>, vector<16x128xf32> -> vector<16x128xf32>
    %113 = arith.addf %109, %112 : vector<16x128xf32>
    %c4_60 = arith.constant 4 : index
    %c0_61 = arith.constant 0 : index
    %114 = vector.load %arg7[%c4_60, %c0_61] : memref<16x128xf32, #tpu.memory_space<vmem>>, vector<1x128xf32>
    %115 = vector.broadcast %114 : vector<1x128xf32> to vector<16x128xf32>
    %116 = arith.addf %113, %115 : vector<16x128xf32>
    %c9 = arith.constant 9 : index
    %c0_62 = arith.constant 0 : index
    %c0_63 = arith.constant 0 : index
    %117 = vector.load %arg6[%c9, %c0_62, %c0_63] : memref<13x128x128xbf16, #tpu.memory_space<vmem>>, vector<1x128x128xbf16>
    %118 = vector.shape_cast %117 : vector<1x128x128xbf16> to vector<128x128xbf16>
    %cst_64 = arith.constant dense<0.000000e+00> : vector<16x128xf32>
    %119 = tpu.matmul %102, %118, %cst_64 {dimension_numbers = #tpu.dot_dimension_numbers<[1], [0], [0], [1], [0, 0, 1, 1], [], []>} : vector<16x128xbf16>, vector<128x128xbf16>, vector<16x128xf32> -> vector<16x128xf32>
    %c10 = arith.constant 10 : index
    %c0_65 = arith.constant 0 : index
    %c0_66 = arith.constant 0 : index
    %120 = vector.load %arg6[%c10, %c0_65, %c0_66] : memref<13x128x128xbf16, #tpu.memory_space<vmem>>, vector<1x128x128xbf16>
    %121 = vector.shape_cast %120 : vector<1x128x128xbf16> to vector<128x128xbf16>
    %cst_67 = arith.constant dense<0.000000e+00> : vector<16x128xf32>
    %122 = tpu.matmul %57, %121, %cst_67 {dimension_numbers = #tpu.dot_dimension_numbers<[1], [0], [0], [1], [0, 0, 1, 1], [], []>} : vector<16x128xbf16>, vector<128x128xbf16>, vector<16x128xf32> -> vector<16x128xf32>
    %123 = arith.addf %119, %122 : vector<16x128xf32>
    %c11 = arith.constant 11 : index
    %c0_68 = arith.constant 0 : index
    %c0_69 = arith.constant 0 : index
    %124 = vector.load %arg6[%c11, %c0_68, %c0_69] : memref<13x128x128xbf16, #tpu.memory_space<vmem>>, vector<1x128x128xbf16>
    %125 = vector.shape_cast %124 : vector<1x128x128xbf16> to vector<128x128xbf16>
    %cst_70 = arith.constant dense<0.000000e+00> : vector<16x128xf32>
    %126 = tpu.matmul %6, %125, %cst_70 {dimension_numbers = #tpu.dot_dimension_numbers<[1], [0], [0], [1], [0, 0, 1, 1], [], []>} : vector<16x128xbf16>, vector<128x128xbf16>, vector<16x128xf32> -> vector<16x128xf32>
    %127 = arith.addf %123, %126 : vector<16x128xf32>
    %c8_71 = arith.constant 8 : index
    %c0_72 = arith.constant 0 : index
    %128 = vector.load %arg7[%c8_71, %c0_72] : memref<16x128xf32, #tpu.memory_space<vmem>>, vector<1x128xf32>
    %129 = vector.broadcast %128 : vector<1x128xf32> to vector<16x128xf32>
    %130 = arith.addf %127, %129 : vector<16x128xf32>
    %131 = arith.negf %130 : vector<16x128xf32>
    %132 = math.exp %131 : vector<16x128xf32>
    %cst_73 = arith.constant 1.000000e+00 : f32
    %133 = vector.broadcast %cst_73 : f32 to vector<16x128xf32>
    %134 = arith.addf %133, %132 : vector<16x128xf32>
    %135 = arith.divf %133, %134 : vector<16x128xf32>
    %c96_i32_74 = arith.constant 96 : i32
    %136 = tpu.dynamic_rotate %130 by %c96_i32_74 dim 1 : vector<16x128xf32>, i32 -> vector<16x128xf32>
    %137 = arith.negf %136 : vector<16x128xf32>
    %138 = math.exp %137 : vector<16x128xf32>
    %cst_75 = arith.constant 1.000000e+00 : f32
    %139 = vector.broadcast %cst_75 : f32 to vector<16x128xf32>
    %140 = arith.addf %139, %138 : vector<16x128xf32>
    %141 = arith.divf %139, %140 : vector<16x128xf32>
    %c64_i32_76 = arith.constant 64 : i32
    %142 = tpu.dynamic_rotate %130 by %c64_i32_76 dim 1 : vector<16x128xf32>, i32 -> vector<16x128xf32>
    %c9_77 = arith.constant 9 : index
    %c0_78 = arith.constant 0 : index
    %143 = vector.load %arg7[%c9_77, %c0_78] : memref<16x128xf32, #tpu.memory_space<vmem>>, vector<1x128xf32>
    %144 = vector.broadcast %143 : vector<1x128xf32> to vector<16x128xf32>
    %145 = arith.mulf %135, %144 : vector<16x128xf32>
    %146 = arith.addf %142, %145 : vector<16x128xf32>
    %147 = math.tanh %146 : vector<16x128xf32>
    %cst_79 = arith.constant 1.000000e+00 : f32
    %148 = vector.broadcast %cst_79 : f32 to vector<16x128xf32>
    %149 = arith.subf %148, %141 : vector<16x128xf32>
    %150 = arith.mulf %149, %147 : vector<16x128xf32>
    %151 = vector.broadcast %4 : vector<1x128xf32> to vector<16x128xf32>
    %152 = arith.mulf %150, %151 : vector<16x128xf32>
    %153 = arith.addf %116, %152 : vector<16x128xf32>
    %154 = arith.truncf %153 : vector<16x128xf32> to vector<16x128xbf16>
    %c12 = arith.constant 12 : index
    %c0_80 = arith.constant 0 : index
    %c0_81 = arith.constant 0 : index
    %155 = vector.load %arg6[%c12, %c0_80, %c0_81] : memref<13x128x128xbf16, #tpu.memory_space<vmem>>, vector<1x128x128xbf16>
    %156 = vector.shape_cast %155 : vector<1x128x128xbf16> to vector<128x128xbf16>
    %cst_82 = arith.constant dense<0.000000e+00> : vector<16x128xf32>
    %157 = tpu.matmul %154, %156, %cst_82 {dimension_numbers = #tpu.dot_dimension_numbers<[1], [0], [0], [1], [0, 0, 1, 1], [], []>} : vector<16x128xbf16>, vector<128x128xbf16>, vector<16x128xf32> -> vector<16x128xf32>
    %c10_83 = arith.constant 10 : index
    %c0_84 = arith.constant 0 : index
    %158 = vector.load %arg7[%c10_83, %c0_84] : memref<16x128xf32, #tpu.memory_space<vmem>>, vector<1x128xf32>
    %159 = vector.broadcast %158 : vector<1x128xf32> to vector<16x128xf32>
    %160 = arith.addf %157, %159 : vector<16x128xf32>
    %161 = arith.negf %160 : vector<16x128xf32>
    %162 = math.exp %161 : vector<16x128xf32>
    %cst_85 = arith.constant 1.000000e+00 : f32
    %163 = vector.broadcast %cst_85 : f32 to vector<16x128xf32>
    %164 = arith.addf %163, %162 : vector<16x128xf32>
    %165 = arith.divf %163, %164 : vector<16x128xf32>
    %c96_i32_86 = arith.constant 96 : i32
    %166 = tpu.dynamic_rotate %160 by %c96_i32_86 dim 1 : vector<16x128xf32>, i32 -> vector<16x128xf32>
    %167 = arith.negf %166 : vector<16x128xf32>
    %168 = math.exp %167 : vector<16x128xf32>
    %cst_87 = arith.constant 1.000000e+00 : f32
    %169 = vector.broadcast %cst_87 : f32 to vector<16x128xf32>
    %170 = arith.addf %169, %168 : vector<16x128xf32>
    %171 = arith.divf %169, %170 : vector<16x128xf32>
    %c64_i32_88 = arith.constant 64 : i32
    %172 = tpu.dynamic_rotate %160 by %c64_i32_88 dim 1 : vector<16x128xf32>, i32 -> vector<16x128xf32>
    %c11_89 = arith.constant 11 : index
    %c0_90 = arith.constant 0 : index
    %173 = vector.load %arg7[%c11_89, %c0_90] : memref<16x128xf32, #tpu.memory_space<vmem>>, vector<1x128xf32>
    %174 = vector.broadcast %173 : vector<1x128xf32> to vector<16x128xf32>
    %175 = arith.mulf %165, %174 : vector<16x128xf32>
    %176 = arith.addf %172, %175 : vector<16x128xf32>
    %177 = math.tanh %176 : vector<16x128xf32>
    %cst_91 = arith.constant 1.000000e+00 : f32
    %178 = vector.broadcast %cst_91 : f32 to vector<16x128xf32>
    %179 = arith.subf %178, %171 : vector<16x128xf32>
    %180 = arith.mulf %179, %177 : vector<16x128xf32>
    %181 = vector.broadcast %4 : vector<1x128xf32> to vector<16x128xf32>
    %182 = arith.mulf %180, %181 : vector<16x128xf32>
    %183 = arith.addf %153, %182 : vector<16x128xf32>
    %184 = arith.truncf %183 : vector<16x128xf32> to vector<16x128xbf16>
    %c3 = arith.constant 3 : index
    %c0_92 = arith.constant 0 : index
    %c0_93 = arith.constant 0 : index
    %185 = vector.load %arg6[%c3, %c0_92, %c0_93] : memref<13x128x128xbf16, #tpu.memory_space<vmem>>, vector<1x128x128xbf16>
    %186 = vector.shape_cast %185 : vector<1x128x128xbf16> to vector<128x128xbf16>
    %cst_94 = arith.constant dense<0.000000e+00> : vector<16x128xf32>
    %187 = tpu.matmul %184, %186, %cst_94 {dimension_numbers = #tpu.dot_dimension_numbers<[1], [0], [0], [1], [0, 0, 1, 1], [], []>} : vector<16x128xbf16>, vector<128x128xbf16>, vector<16x128xf32> -> vector<16x128xf32>
    %c3_95 = arith.constant 3 : index
    %c0_96 = arith.constant 0 : index
    %188 = vector.load %arg7[%c3_95, %c0_96] : memref<16x128xf32, #tpu.memory_space<vmem>>, vector<1x128xf32>
    %189 = vector.broadcast %188 : vector<1x128xf32> to vector<16x128xf32>
    %190 = arith.addf %187, %189 : vector<16x128xf32>
    %c0_97 = arith.constant 0 : index
    %c0_98 = arith.constant 0 : index
    %191 = vector.load %arg8[%c0_97, %c0_98] : memref<16x128xf32, #tpu.memory_space<vmem>>, vector<16x128xf32>
    tpu.vector_store %arg8[%c0_97, %c0_98], %190 {strides = array<i32>} : memref<16x128xf32, #tpu.memory_space<vmem>>, vector<16x128xf32>,
    return
  }
  func.func @transform_0(%arg0: i32) -> (i32, i32, i32) {
    %c0_i32 = arith.constant 0 : i32
    %c0_i32_0 = arith.constant 0 : i32
    %c0_i32_1 = arith.constant 0 : i32
    return %arg0, %c0_i32, %c0_i32_0 : i32, i32, i32
  }
  func.func @transform_1(%arg0: i32) -> (i32, i32, i32) {
    %c0_i32 = arith.constant 0 : i32
    %c0_i32_0 = arith.constant 0 : i32
    %c0_i32_1 = arith.constant 0 : i32
    return %arg0, %c0_i32, %c0_i32_0 : i32, i32, i32
  }
  func.func @transform_2(%arg0: i32) -> (i32, i32) {
    %c0_i32 = arith.constant 0 : i32
    %c0_i32_0 = arith.constant 0 : i32
    return %arg0, %c0_i32 : i32, i32
  }
  func.func @transform_3(%arg0: i32) -> (i32, i32) {
    %c0_i32 = arith.constant 0 : i32
    %c0_i32_0 = arith.constant 0 : i32
    return %arg0, %c0_i32 : i32, i32
  }
  func.func @transform_4(%arg0: i32) -> (i32, i32) {
    %c0_i32 = arith.constant 0 : i32
    %c0_i32_0 = arith.constant 0 : i32
    return %arg0, %c0_i32 : i32, i32
  }
  func.func @transform_5(%arg0: i32) -> (i32, i32, i32) {
    %c0_i32 = arith.constant 0 : i32
    %c0_i32_0 = arith.constant 0 : i32
    %c0_i32_1 = arith.constant 0 : i32
    %c0_i32_2 = arith.constant 0 : i32
    return %c0_i32, %c0_i32_0, %c0_i32_1 : i32, i32, i32
  }
  func.func @transform_6(%arg0: i32) -> (i32, i32) {
    %c0_i32 = arith.constant 0 : i32
    %c0_i32_0 = arith.constant 0 : i32
    %c0_i32_1 = arith.constant 0 : i32
    return %c0_i32, %c0_i32_0 : i32, i32
  }
  func.func @transform_7(%arg0: i32) -> (i32, i32) {
    %c0_i32 = arith.constant 0 : i32
    %c0_i32_0 = arith.constant 0 : i32
    return %arg0, %c0_i32 : i32, i32
  }
  func.func @transform_8(%arg0: i32) -> (i32, i32) {
    %c0_i32 = arith.constant 0 : i32
    %c0_i32_0 = arith.constant 0 : i32
    return %arg0, %c0_i32 : i32, i32
  }
}

</mosaic_0001>

<llo_original>
// kernel: tpu_custom_call.1
$region0: #{tpu_custom_call.1}
  #allocation0 [shape = 'u32[]', space=smem, size = 0x4, offset = 0x4, fixed_abs, tag = 'smem constant byte address 0x4 - core index']
  #allocation1 [shape = 'u32[144,128]{1,0:T(1,128)}', space=vmem, size = 0x12000, scoped, tag = 'internal scratch']
  %s0 = inlined_call_operand.hbm [shape: bf16[16,16,128], index: 0, kind: input, shape index: {}]
  %s1 = inlined_call_operand.hbm [shape: bf16[16,16,128], index: 1, kind: input, shape index: {}]
  %s2 = inlined_call_operand.vmem [shape: bf16[16,128], index: 2, kind: input, shape index: {}]
  %s3 = inlined_call_operand.hbm [shape: bf16[16,128], index: 3, kind: input, shape index: {}]
  %s4 = inlined_call_operand.vmem [shape: s32[16,1], index: 4, kind: input, shape index: {}]
  %s5 = inlined_call_operand.hbm [shape: bf16[13,128,128], index: 5, kind: input, shape index: {}]
  %s6 = inlined_call_operand.vmem [shape: f32[16,128], index: 6, kind: input, shape index: {}]
  %s7 = inlined_call_operand.hbm [shape: f32[16,128], index: 7, kind: output, shape index: {0}]
  %s8 = inlined_call_operand.hbm [shape: f32[16,128], index: 8, kind: output, shape index: {1}]
  %9 = xla_tuple %s7, %s8
  %s10 = sld [smem:[#allocation0]]
  $region62: #{tpu_custom_call.1} parent=0
    _
  %s12 = ssub.s32 1, %s10
  %s13 = scalar_select 0, %s12, %s10
  $region1: #{tpu_custom_call.1} parent=0
    #allocation2 [shape = 'u8[65536]{0}', space=vmem, size = 0x10000, scoped, tag = 'input window, operand 0, single buffered']
    #allocation3 [shape = 's32[1]{0}', space=sflag, size = 0x4, scoped, tag = 'scoped memory for tpu_custom_call.1']
    #allocation4 [shape = 's32[1]{0}', space=sflag, size = 0x4, scoped, tag = 'scoped memory for tpu_custom_call.1']
    #allocation5 [shape = 'u8[65536]{0}', space=vmem, size = 0x10000, scoped, tag = 'input window, operand 1, single buffered']
    #allocation6 [shape = 's32[1]{0}', space=sflag, size = 0x4, scoped, tag = 'scoped memory for tpu_custom_call.1']
    #allocation7 [shape = 'u8[4096]{0}', space=vmem, size = 0x1000, scoped, tag = 'input window, operand 3, single buffered']
    #allocation8 [shape = 'u8[425984]{0}', space=vmem, size = 0x68000, scoped, tag = 'input window, operand 5, single buffered']
    #allocation9 [shape = 's32[1]{0}', space=sflag, size = 0x4, scoped, tag = 'scoped memory for tpu_custom_call.1']
    #allocation10 [shape = 'u8[8192]{0}', space=vmem, size = 0x2000, scoped, tag = 'output window, operand 0, single buffered']
    #allocation11 [shape = 'u8[8192]{0}', space=vmem, size = 0x2000, scoped, tag = 'output window, operand 1, single buffered']
    #allocation12 [shape = 's32[1]{0}', space=sflag, size = 0x4, scoped, tag = 'scoped memory for tpu_custom_call.1']
    %14 = vsyncpa [#allocation3], 0
    %15 = vsyncpa [#allocation6], 0
    %16 = vsyncpa [#allocation9], 0
    %17 = vsyncpa [#allocation4], 0
    %18 = vsyncpa [#allocation12], 0
    // Predicated region
    $region2: #{tpu_custom_call.1} parent=1 // pred_check
      _
    $region3: #{tpu_custom_call.1} parent=1 // pred_check_branch
      %20 = sbr.rel (0) target = $region5
    $region4: #{tpu_custom_call.1} parent=1 // pred_region
      %s22 = ssub.s32 2048, 2048
      %23 = vsyncadd [#allocation3], %s22
      %s24 = sshll.u32 [#allocation2], 4
      %s25 = int_to_ptr.vmem [resolvable:$true] %s24
      %30 = dma.hbm_to_vmem [thread:$0]  %s0, 2048, %s25, [#allocation3], 64, 64, 4
    $region5: #{tpu_custom_call.1} parent=1 // pred_fallthru
      _
    // Predicated region
    $region6: #{tpu_custom_call.1} parent=1 // pred_check
      _
    $region7: #{tpu_custom_call.1} parent=1 // pred_check_branch
      %32 = sbr.rel (0) target = $region9
    $region8: #{tpu_custom_call.1} parent=1 // pred_region
      %s34 = ssub.s32 2048, 2048
      %35 = vsyncadd [#allocation6], %s34
      %s36 = sshll.u32 [#allocation5], 4
      %s37 = int_to_ptr.vmem [resolvable:$true] %s36
      %42 = dma.hbm_to_vmem [thread:$0]  %s1, 2048, %s37, [#allocation6], 64, 64, 4
    $region9: #{tpu_custom_call.1} parent=1 // pred_fallthru
      _
    // Predicated region
    $region10: #{tpu_custom_call.1} parent=1 // pred_check
      _
    $region11: #{tpu_custom_call.1} parent=1 // pred_check_branch
      %44 = sbr.rel (0) target = $region13
    $region12: #{tpu_custom_call.1} parent=1 // pred_region
      _
    $region13: #{tpu_custom_call.1} parent=1 // pred_fallthru
      _
    // Predicated region
    $region14: #{tpu_custom_call.1} parent=1 // pred_check
      _
    $region15: #{tpu_custom_call.1} parent=1 // pred_check_branch
      %46 = sbr.rel (0) target = $region17
    $region16: #{tpu_custom_call.1} parent=1 // pred_region
      %s48 = ssub.s32 128, 128
      %49 = vsyncadd [#allocation6], %s48
      %s50 = sshll.u32 [#allocation7], 4
      %s51 = int_to_ptr.vmem [resolvable:$true] %s50
      %56 = dma.hbm_to_vmem [thread:$0]  %s3, 128, %s51, [#allocation6], 64, 64, 4
    $region17: #{tpu_custom_call.1} parent=1 // pred_fallthru
      _
    // Predicated region
    $region18: #{tpu_custom_call.1} parent=1 // pred_check
      _
    $region19: #{tpu_custom_call.1} parent=1 // pred_check_branch
      %58 = sbr.rel (0) target = $region21
    $region20: #{tpu_custom_call.1} parent=1 // pred_region
      _
    $region21: #{tpu_custom_call.1} parent=1 // pred_fallthru
      _
    // Predicated region
    $region22: #{tpu_custom_call.1} parent=1 // pred_check
      _
    $region23: #{tpu_custom_call.1} parent=1 // pred_check_branch
      %60 = sbr.rel (0) target = $region25
    $region24: #{tpu_custom_call.1} parent=1 // pred_region
      %s62 = ssub.s32 13312, 13312
      %63 = vsyncadd [#allocation9], %s62
      %s64 = sshll.u32 [#allocation8], 4
      %s65 = int_to_ptr.vmem [resolvable:$true] %s64
      %70 = dma.hbm_to_vmem [thread:$0]  %s5, 13312, %s65, [#allocation9], 64, 64, 4
    $region25: #{tpu_custom_call.1} parent=1 // pred_fallthru
      _
    // Predicated region
    $region26: #{tpu_custom_call.1} parent=1 // pred_check
      _
    $region27: #{tpu_custom_call.1} parent=1 // pred_check_branch
      %72 = sbr.rel (0) target = $region29
    $region28: #{tpu_custom_call.1} parent=1 // pred_region
      _
    $region29: #{tpu_custom_call.1} parent=1 // pred_fallthru
      _
    // Predicated region
    $region30: #{tpu_custom_call.1} parent=1 // pred_check
      _
    $region31: #{tpu_custom_call.1} parent=1 // pred_check_branch
      %74 = sbr.rel (0) target = $region33
    $region32: #{tpu_custom_call.1} parent=1 // pred_region
      %75 = dma.done [#allocation3], 2048
    $region33: #{tpu_custom_call.1} parent=1 // pred_fallthru
      _
    // Predicated region
    $region34: #{tpu_custom_call.1} parent=1 // pred_check
      _
    $region35: #{tpu_custom_call.1} parent=1 // pred_check_branch
      %77 = sbr.rel (0) target = $region37
    $region36: #{tpu_custom_call.1} parent=1 // pred_region
      %78 = dma.done [#allocation6], 2048
    $region37: #{tpu_custom_call.1} parent=1 // pred_fallthru
      _
    // Predicated region
    $region38: #{tpu_custom_call.1} parent=1 // pred_check
      _
    $region39: #{tpu_custom_call.1} parent=1 // pred_check_branch
      %80 = sbr.rel (0) target = $region41
    $region40: #{tpu_custom_call.1} parent=1 // pred_region
      %81 = dma.done [#allocation6], 128
    $region41: #{tpu_custom_call.1} parent=1 // pred_fallthru
      _
    // Predicated region
    $region42: #{tpu_custom_call.1} parent=1 // pred_check
      _
    $region43: #{tpu_custom_call.1} parent=1 // pred_check_branch
      %83 = sbr.rel (0) target = $region45
    $region44: #{tpu_custom_call.1} parent=1 // pred_region
      %84 = dma.done [#allocation9], 13312
    $region45: #{tpu_custom_call.1} parent=1 // pred_fallthru
      _
    %v86 = vlaneseq
    %v87 = vand.u32 %v86, 127
    %vm88 = vcmp.lt.s32.totalorder %v87, 32
    %v89 = vsel %vm88, 1, 0
    %v90 = vcvt.s32.f32 %v89
    %v91 = vld [vmem:[%s2] sm:$0xf]
    %v92 = vld [vmem:[%s2 + $0x4] sm:$0xf]
    %v93 = vld [vmem:[#allocation7] sm:$0xf]
    %v94 = vld [vmem:[#allocation7 + $0x4] sm:$0xf]
    %v95 = vld [vmem:[#allocation8] sm:$0xf]
    %v96 = vld [vmem:[#allocation8 + $0x4] sm:$0xf]
    %v97 = vld [vmem:[#allocation8 + $0x8] sm:$0xf]
    %v98 = vld [vmem:[#allocation8 + $0xc] sm:$0xf]
    %v99 = vld [vmem:[#allocation8 + $0x10] sm:$0xf]
    %v100 = vld [vmem:[#allocation8 + $0x14] sm:$0xf]
    %v101 = vld [vmem:[#allocation8 + $0x18] sm:$0xf]
    %v102 = vld [vmem:[#allocation8 + $0x1c] sm:$0xf]
    %v103 = vld [vmem:[#allocation8 + $0x20] sm:$0xf]
    %v104 = vld [vmem:[#allocation8 + $0x24] sm:$0xf]
    %v105 = vld [vmem:[#allocation8 + $0x28] sm:$0xf]
    %v106 = vld [vmem:[#allocation8 + $0x2c] sm:$0xf]
    %v107 = vld [vmem:[#allocation8 + $0x30] sm:$0xf]
    %v108 = vld [vmem:[#allocation8 + $0x34] sm:$0xf]
    %v109 = vld [vmem:[#allocation8 + $0x38] sm:$0xf]
    %v110 = vld [vmem:[#allocation8 + $0x3c] sm:$0xf]
    %v111 = vld [vmem:[%s6] sm:$0x1]
    %v112 = vlaneseq
    %v113 = vshrl.u32 %v112, 7
    %v114 = vsub.s32 0, %v113
    %v115 = vrot.slane %v111, %v114
    %v118 = vunpack.c.l.b16 %v91
    %v119 = vunpack.c.l.b16 %v92
    %v120 = vpack.c.b16 %v119, %v118
    %v138 = vunpack.c.l.b16 %v95
    %v139 = vunpack.c.l.b16 %v96
    %v140 = vunpack.c.l.b16 %v97
    %v141 = vunpack.c.l.b16 %v98
    %v142 = vunpack.c.l.b16 %v99
    %v143 = vunpack.c.l.b16 %v100
    %v144 = vunpack.c.l.b16 %v101
    %v145 = vunpack.c.l.b16 %v102
    %v146 = vunpack.c.l.b16 %v103
    %v147 = vunpack.c.l.b16 %v104
    %v148 = vunpack.c.l.b16 %v105
    %v149 = vunpack.c.l.b16 %v106
    %v150 = vunpack.c.l.b16 %v107
    %v151 = vunpack.c.l.b16 %v108
    %v152 = vunpack.c.l.b16 %v109
    %v153 = vunpack.c.l.b16 %v110
    %v154 = vpack.c.b16 %v139, %v138
    %v155 = vpack.c.b16 %v141, %v140
    %v156 = vpack.c.b16 %v143, %v142
    %v157 = vpack.c.b16 %v145, %v144
    %v158 = vpack.c.b16 %v147, %v146
    %v159 = vpack.c.b16 %v149, %v148
    %v160 = vpack.c.b16 %v151, %v150
    %v161 = vpack.c.b16 %v153, %v152
    %170 = vmatprep.subr.bf16.mxu0 0
    %171 = vmatpush1.bf16.msra.mxu0 %v161
    %172 = vmatprep.subr.bf16.mxu0 0
    %173 = vmatpush1.bf16.msra.mxu0 %v160
    %174 = vmatprep.subr.bf16.mxu0 0
    %175 = vmatpush1.bf16.msra.mxu0 %v159
    %176 = vmatprep.subr.bf16.mxu0 0
    %177 = vmatpush1.bf16.msra.mxu0 %v158
    %178 = vmatprep.subr.bf16.mxu0 0
    %179 = vmatpush1.bf16.msra.mxu0 %v157
    %180 = vmatprep.subr.bf16.mxu0 0
    %181 = vmatpush1.bf16.msra.mxu0 %v156
    %182 = vmatprep.subr.bf16.mxu0 0
    %183 = vmatpush1.bf16.msra.mxu0 %v155
    %184 = vmatprep.subr.bf16.mxu0 0
    %185 = vmatpush1.bf16.msra.mxu0 %v154
    %186 = vmatprep.subr.bf16.mxu0 0
    %187 = vmatpush2.bf16.msra.mxu0 0
    %188 = vmatprep.subr.bf16.mxu0 0
    %189 = vmatpush2.bf16.msra.mxu0 0
    %190 = vmatprep.subr.bf16.mxu0 0
    %191 = vmatpush2.bf16.msra.mxu0 0
    %192 = vmatprep.subr.bf16.mxu0 0
    %193 = vmatpush2.bf16.msra.mxu0 0
    %194 = vmatprep.subr.bf16.mxu0 0
    %195 = vmatpush2.bf16.msra.mxu0 0
    %196 = vmatprep.subr.bf16.mxu0 0
    %197 = vmatpush2.bf16.msra.mxu0 0
    %198 = vmatprep.subr.bf16.mxu0 0
    %199 = vmatpush2.bf16.msra.mxu0 0
    %200 = vmatprep.subr.bf16.mxu0 0
    %201 = vmatpush2.bf16.msra.mxu0 0
    %202 = vmatprep.mubr.bf16.mxu0 0
    %203 = vmatmul.mubr.bf16.gmra.mxu0 %v120
    %v204 = vpop.f32.mrf.mxu0
    %v205 = vadd.f32 %v115, %v204
    %v206 = vpop.f32.mrf.mxu0
    %v207 = vpop.f32.mrf.mxu0
    %v208 = vadd.f32 %v115, %v207
    %v209 = vpop.f32.mrf.mxu0
    %210 = vdwg.mxu0
    %v211 = vmax.f32 %v205, 0.0
    %v212 = vmax.f32 %v208, 0.0
    %v213 = vpack.c.bf16 %v212, %v211
    %s214 = scalar_lea.vmem [#allocation8], 64
    %v215 = vld [vmem:[%s214] sm:$0xf]
    %v216 = vld [vmem:[%s214 + $0x4] sm:$0xf]
    %v217 = vld [vmem:[%s214 + $0x8] sm:$0xf]
    %v218 = vld [vmem:[%s214 + $0xc] sm:$0xf]
    %v219 = vld [vmem:[%s214 + $0x10] sm:$0xf]
    %v220 = vld [vmem:[%s214 + $0x14] sm:$0xf]
    %v221 = vld [vmem:[%s214 + $0x18] sm:$0xf]
    %v222 = vld [vmem:[%s214 + $0x1c] sm:$0xf]
    %v223 = vld [vmem:[%s214 + $0x20] sm:$0xf]
    %v224 = vld [vmem:[%s214 + $0x24] sm:$0xf]
    %v225 = vld [vmem:[%s214 + $0x28] sm:$0xf]
    %v226 = vld [vmem:[%s214 + $0x2c] sm:$0xf]
    %v227 = vld [vmem:[%s214 + $0x30] sm:$0xf]
    %v228 = vld [vmem:[%s214 + $0x34] sm:$0xf]
    %v229 = vld [vmem:[%s214 + $0x38] sm:$0xf]
    %v230 = vld [vmem:[%s214 + $0x3c] sm:$0xf]
    %v231 = vld [vmem:[%s6 + $0x1] sm:$0x1]
    %v232 = vlaneseq
    %v233 = vshrl.u32 %v232, 7
    %v234 = vsub.s32 0, %v233
    %v235 = vrot.slane %v231, %v234
    %v252 = vunpack.c.l.b16 %v215
    %v253 = vunpack.c.l.b16 %v216
    %v254 = vunpack.c.l.b16 %v217
    %v255 = vunpack.c.l.b16 %v218
    %v256 = vunpack.c.l.b16 %v219
    %v257 = vunpack.c.l.b16 %v220
    %v258 = vunpack.c.l.b16 %v221
    %v259 = vunpack.c.l.b16 %v222
    %v260 = vunpack.c.l.b16 %v223
    %v261 = vunpack.c.l.b16 %v224
    %v262 = vunpack.c.l.b16 %v225
    %v263 = vunpack.c.l.b16 %v226
    %v264 = vunpack.c.l.b16 %v227
    %v265 = vunpack.c.l.b16 %v228
    %v266 = vunpack.c.l.b16 %v229
    %v267 = vunpack.c.l.b16 %v230
    %v268 = vpack.c.b16 %v253, %v252
    %v269 = vpack.c.b16 %v255, %v254
    %v270 = vpack.c.b16 %v257, %v256
    %v271 = vpack.c.b16 %v259, %v258
    %v272 = vpack.c.b16 %v261, %v260
    %v273 = vpack.c.b16 %v263, %v262
    %v274 = vpack.c.b16 %v265, %v264
    %v275 = vpack.c.b16 %v267, %v266
    %284 = vmatprep.subr.bf16.mxu0 0
    %285 = vmatpush1.bf16.msra.mxu0 %v275
    %286 = vmatprep.subr.bf16.mxu0 0
    %287 = vmatpush1.bf16.msra.mxu0 %v274
    %288 = vmatprep.subr.bf16.mxu0 0
    %289 = vmatpush1.bf16.msra.mxu0 %v273
    %290 = vmatprep.subr.bf16.mxu0 0
    %291 = vmatpush1.bf16.msra.mxu0 %v272
    %292 = vmatprep.subr.bf16.mxu0 0
    %293 = vmatpush1.bf16.msra.mxu0 %v271
    %294 = vmatprep.subr.bf16.mxu0 0
    %295 = vmatpush1.bf16.msra.mxu0 %v270
    %296 = vmatprep.subr.bf16.mxu0 0
    %297 = vmatpush1.bf16.msra.mxu0 %v269
    %298 = vmatprep.subr.bf16.mxu0 0
    %299 = vmatpush1.bf16.msra.mxu0 %v268
    %300 = vmatprep.subr.bf16.mxu0 0
    %301 = vmatpush2.bf16.msra.mxu0 0
    %302 = vmatprep.subr.bf16.mxu0 0
    %303 = vmatpush2.bf16.msra.mxu0 0
    %304 = vmatprep.subr.bf16.mxu0 0
    %305 = vmatpush2.bf16.msra.mxu0 0
    %306 = vmatprep.subr.bf16.mxu0 0
    %307 = vmatpush2.bf16.msra.mxu0 0
    %308 = vmatprep.subr.bf16.mxu0 0
    %309 = vmatpush2.bf16.msra.mxu0 0
    %310 = vmatprep.subr.bf16.mxu0 0
    %311 = vmatpush2.bf16.msra.mxu0 0
    %312 = vmatprep.subr.bf16.mxu0 0
    %313 = vmatpush2.bf16.msra.mxu0 0
    %314 = vmatprep.subr.bf16.mxu0 0
    %315 = vmatpush2.bf16.msra.mxu0 0
    %316 = vmatprep.mubr.bf16.mxu0 0
    %317 = vmatmul.mubr.bf16.gmra.mxu0 %v213
    %v318 = vpop.f32.mrf.mxu0
    %v319 = vadd.f32 %v235, %v318
    %v320 = vpop.f32.mrf.mxu0
    %v321 = vpop.f32.mrf.mxu0
    %v322 = vadd.f32 %v235, %v321
    %v323 = vpop.f32.mrf.mxu0
    %324 = vdwg.mxu0
    %v325 = vmax.f32 %v319, 0.0
    %v326 = vmax.f32 %v322, 0.0
    %v327 = vpack.c.bf16 %v326, %v325
    %s328 = scalar_lea.vmem [#allocation8], 448
    %v329 = vld [vmem:[%s328] sm:$0xf]
    %v330 = vld [vmem:[%s328 + $0x4] sm:$0xf]
    %v331 = vld [vmem:[%s328 + $0x8] sm:$0xf]
    %v332 = vld [vmem:[%s328 + $0xc] sm:$0xf]
    %v333 = vld [vmem:[%s328 + $0x10] sm:$0xf]
    %v334 = vld [vmem:[%s328 + $0x14] sm:$0xf]
    %v335 = vld [vmem:[%s328 + $0x18] sm:$0xf]
    %v336 = vld [vmem:[%s328 + $0x1c] sm:$0xf]
    %v337 = vld [vmem:[%s328 + $0x20] sm:$0xf]
    %v338 = vld [vmem:[%s328 + $0x24] sm:$0xf]
    %v339 = vld [vmem:[%s328 + $0x28] sm:$0xf]
    %v340 = vld [vmem:[%s328 + $0x2c] sm:$0xf]
    %v341 = vld [vmem:[%s328 + $0x30] sm:$0xf]
    %v342 = vld [vmem:[%s328 + $0x34] sm:$0xf]
    %v343 = vld [vmem:[%s328 + $0x38] sm:$0xf]
    %v344 = vld [vmem:[%s328 + $0x3c] sm:$0xf]
    %s345 = scalar_lea.vmem [#allocation8], 512
    %v346 = vld [vmem:[%s345] sm:$0xf]
    %v347 = vld [vmem:[%s345 + $0x4] sm:$0xf]
    %v348 = vld [vmem:[%s345 + $0x8] sm:$0xf]
    %v349 = vld [vmem:[%s345 + $0xc] sm:$0xf]
    %v350 = vld [vmem:[%s345 + $0x10] sm:$0xf]
    %v351 = vld [vmem:[%s345 + $0x14] sm:$0xf]
    %v352 = vld [vmem:[%s345 + $0x18] sm:$0xf]
    %v353 = vld [vmem:[%s345 + $0x1c] sm:$0xf]
    %v354 = vld [vmem:[%s345 + $0x20] sm:$0xf]
    %v355 = vld [vmem:[%s345 + $0x24] sm:$0xf]
    %v356 = vld [vmem:[%s345 + $0x28] sm:$0xf]
    %v357 = vld [vmem:[%s345 + $0x2c] sm:$0xf]
    %v358 = vld [vmem:[%s345 + $0x30] sm:$0xf]
    %v359 = vld [vmem:[%s345 + $0x34] sm:$0xf]
    %v360 = vld [vmem:[%s345 + $0x38] sm:$0xf]
    %v361 = vld [vmem:[%s345 + $0x3c] sm:$0xf]
    %v364 = vunpack.c.l.b16 %v93
    %v365 = vunpack.c.l.b16 %v94
    %v366 = vpack.c.b16 %v365, %v364
    %v384 = vunpack.c.l.b16 %v346
    %v385 = vunpack.c.l.b16 %v347
    %v386 = vunpack.c.l.b16 %v348
    %v387 = vunpack.c.l.b16 %v349
    %v388 = vunpack.c.l.b16 %v350
    %v389 = vunpack.c.l.b16 %v351
    %v390 = vunpack.c.l.b16 %v352
    %v391 = vunpack.c.l.b16 %v353
    %v392 = vunpack.c.l.b16 %v354
    %v393 = vunpack.c.l.b16 %v355
    %v394 = vunpack.c.l.b16 %v356
    %v395 = vunpack.c.l.b16 %v357
    %v396 = vunpack.c.l.b16 %v358
    %v397 = vunpack.c.l.b16 %v359
    %v398 = vunpack.c.l.b16 %v360
    %v399 = vunpack.c.l.b16 %v361
    %v400 = vpack.c.b16 %v385, %v384
    %v401 = vpack.c.b16 %v387, %v386
    %v402 = vpack.c.b16 %v389, %v388
    %v403 = vpack.c.b16 %v391, %v390
    %v404 = vpack.c.b16 %v393, %v392
    %v405 = vpack.c.b16 %v395, %v394
    %v406 = vpack.c.b16 %v397, %v396
    %v407 = vpack.c.b16 %v399, %v398
    %416 = vmatprep.subr.bf16.mxu0 0
    %417 = vmatpush1.bf16.msra.mxu0 %v407
    %418 = vmatprep.subr.bf16.mxu0 0
    %419 = vmatpush1.bf16.msra.mxu0 %v406
    %420 = vmatprep.subr.bf16.mxu0 0
    %421 = vmatpush1.bf16.msra.mxu0 %v405
    %422 = vmatprep.subr.bf16.mxu0 0
    %423 = vmatpush1.bf16.msra.mxu0 %v404
    %424 = vmatprep.subr.bf16.mxu0 0
    %425 = vmatpush1.bf16.msra.mxu0 %v403
    %426 = vmatprep.subr.bf16.mxu0 0
    %427 = vmatpush1.bf16.msra.mxu0 %v402
    %428 = vmatprep.subr.bf16.mxu0 0
    %429 = vmatpush1.bf16.msra.mxu0 %v401
    %430 = vmatprep.subr.bf16.mxu0 0
    %431 = vmatpush1.bf16.msra.mxu0 %v400
    %432 = vmatprep.subr.bf16.mxu0 0
    %433 = vmatpush2.bf16.msra.mxu0 0
    %434 = vmatprep.subr.bf16.mxu0 0
    %435 = vmatpush2.bf16.msra.mxu0 0
    %436 = vmatprep.subr.bf16.mxu0 0
    %437 = vmatpush2.bf16.msra.mxu0 0
    %438 = vmatprep.subr.bf16.mxu0 0
    %439 = vmatpush2.bf16.msra.mxu0 0
    %440 = vmatprep.subr.bf16.mxu0 0
    %441 = vmatpush2.bf16.msra.mxu0 0
    %442 = vmatprep.subr.bf16.mxu0 0
    %443 = vmatpush2.bf16.msra.mxu0 0
    %444 = vmatprep.subr.bf16.mxu0 0
    %445 = vmatpush2.bf16.msra.mxu0 0
    %446 = vmatprep.subr.bf16.mxu0 0
    %447 = vmatpush2.bf16.msra.mxu0 0
    %448 = vmatprep.mubr.bf16.mxu0 0
    %449 = vmatmul.mubr.bf16.gmra.mxu0 %v366
    %v450 = vpop.f32.mrf.mxu0
    %v451 = vadd.f32 0.0, %v450
    %v452 = vpop.f32.mrf.mxu0
    %v453 = vpop.f32.mrf.mxu0
    %v454 = vadd.f32 0.0, %v453
    %v455 = vpop.f32.mrf.mxu0
    %456 = vdwg.mxu0
    %v473 = vunpack.c.l.b16 %v329
    %v474 = vunpack.c.l.b16 %v330
    %v475 = vunpack.c.l.b16 %v331
    %v476 = vunpack.c.l.b16 %v332
    %v477 = vunpack.c.l.b16 %v333
    %v478 = vunpack.c.l.b16 %v334
    %v479 = vunpack.c.l.b16 %v335
    %v480 = vunpack.c.l.b16 %v336
    %v481 = vunpack.c.l.b16 %v337
    %v482 = vunpack.c.l.b16 %v338
    %v483 = vunpack.c.l.b16 %v339
    %v484 = vunpack.c.l.b16 %v340
    %v485 = vunpack.c.l.b16 %v341
    %v486 = vunpack.c.l.b16 %v342
    %v487 = vunpack.c.l.b16 %v343
    %v488 = vunpack.c.l.b16 %v344
    %v489 = vpack.c.b16 %v474, %v473
    %v490 = vpack.c.b16 %v476, %v475
    %v491 = vpack.c.b16 %v478, %v477
    %v492 = vpack.c.b16 %v480, %v479
    %v493 = vpack.c.b16 %v482, %v481
    %v494 = vpack.c.b16 %v484, %v483
    %v495 = vpack.c.b16 %v486, %v485
    %v496 = vpack.c.b16 %v488, %v487
    %505 = vmatprep.subr.bf16.mxu0 0
    %506 = vmatpush1.bf16.msra.mxu0 %v496
    %507 = vmatprep.subr.bf16.mxu0 0
    %508 = vmatpush1.bf16.msra.mxu0 %v495
    %509 = vmatprep.subr.bf16.mxu0 0
    %510 = vmatpush1.bf16.msra.mxu0 %v494
    %511 = vmatprep.subr.bf16.mxu0 0
    %512 = vmatpush1.bf16.msra.mxu0 %v493
    %513 = vmatprep.subr.bf16.mxu0 0
    %514 = vmatpush1.bf16.msra.mxu0 %v492
    %515 = vmatprep.subr.bf16.mxu0 0
    %516 = vmatpush1.bf16.msra.mxu0 %v491
    %517 = vmatprep.subr.bf16.mxu0 0
    %518 = vmatpush1.bf16.msra.mxu0 %v490
    %519 = vmatprep.subr.bf16.mxu0 0
    %520 = vmatpush1.bf16.msra.mxu0 %v489
    %521 = vmatprep.subr.bf16.mxu0 0
    %522 = vmatpush2.bf16.msra.mxu0 0
    %523 = vmatprep.subr.bf16.mxu0 0
    %524 = vmatpush2.bf16.msra.mxu0 0
    %525 = vmatprep.subr.bf16.mxu0 0
    %526 = vmatpush2.bf16.msra.mxu0 0
    %527 = vmatprep.subr.bf16.mxu0 0
    %528 = vmatpush2.bf16.msra.mxu0 0
    %529 = vmatprep.subr.bf16.mxu0 0
    %530 = vmatpush2.bf16.msra.mxu0 0
    %531 = vmatprep.subr.bf16.mxu0 0
    %532 = vmatpush2.bf16.msra.mxu0 0
    %533 = vmatprep.subr.bf16.mxu0 0
    %534 = vmatpush2.bf16.msra.mxu0 0
    %535 = vmatprep.subr.bf16.mxu0 0
    %536 = vmatpush2.bf16.msra.mxu0 0
    %537 = vmatprep.mubr.bf16.mxu0 0
    %538 = vmatmul.mubr.bf16.gmra.mxu0 %v327
    %v539 = vpop.f32.mrf.mxu0
    %v540 = vadd.f32 %v451, %v539
    %v541 = vpop.f32.mrf.mxu0
    %v542 = vpop.f32.mrf.mxu0
    %v543 = vadd.f32 %v454, %v542
    %v544 = vpop.f32.mrf.mxu0
    %545 = vdwg.mxu0
    %v546 = vld [vmem:[%s6 + $0x6] sm:$0x1]
    %v547 = vlaneseq
    %v548 = vshrl.u32 %v547, 7
    %v549 = vsub.s32 0, %v548
    %v550 = vrot.slane %v546, %v549
    %v551 = vadd.f32 %v540, %v550
    %v552 = vadd.f32 %v543, %v550
    %v553 = vxor.u32 %v551, 2147483648
    %v554 = vxor.u32 %v552, 2147483648
    %v555 = vmul.f32 %v553, 1.442695
    %v556 = vpow.pop %v555
    %v557 = vmul.f32 %v554, 1.442695
    %v558 = vpow.pop %v557
    %v559 = vadd.f32 %v556, 1.0
    %v560 = vadd.f32 %v558, 1.0
    %v561 = vrcp.pop %v559
    %v562 = vmul.f32 1.0, %v561
    %v563 = vrcp.pop %v560
    %v564 = vmul.f32 1.0, %v563
    %565 = vrot.lane.b32.xlu0 %v551, 96
    %v566 = vpop.permute.xlu0 %565
    %567 = vrot.lane.b32.xlu0 %v552, 96
    %v568 = vpop.permute.xlu0 %567
    %v569 = vxor.u32 %v566, 2147483648
    %v570 = vxor.u32 %v568, 2147483648
    %v571 = vmul.f32 %v569, 1.442695
    %v572 = vpow.pop %v571
    %v573 = vmul.f32 %v570, 1.442695
    %v574 = vpow.pop %v573
    %v575 = vadd.f32 %v572, 1.0
    %v576 = vadd.f32 %v574, 1.0
    %v577 = vrcp.pop %v575
    %v578 = vmul.f32 1.0, %v577
    %v579 = vrcp.pop %v576
    %v580 = vmul.f32 1.0, %v579
    %581 = vrot.lane.b32.xlu0 %v551, 64
    %v582 = vpop.permute.xlu0 %581
    %583 = vrot.lane.b32.xlu0 %v552, 64
    %v584 = vpop.permute.xlu0 %583
    %v585 = vld [vmem:[%s6 + $0x7] sm:$0x1]
    %v586 = vlaneseq
    %v587 = vshrl.u32 %v586, 7
    %v588 = vsub.s32 0, %v587
    %v589 = vrot.slane %v585, %v588
    %v590 = vmul.f32 %v562, %v589
    %v591 = vmul.f32 %v564, %v589
    %v592 = vadd.f32 %v582, %v590
    %v593 = vadd.f32 %v584, %v591
    %v594 = vtanh.pop %v592
    %v595 = vtanh.pop %v593
    %v596 = vsub.f32 1.0, %v578
    %v597 = vsub.f32 1.0, %v580
    %v598 = vmul.f32 %v596, %v594
    %v599 = vmul.f32 %v597, %v595
    %v600 = vmul.f32 %v598, %v90
    %v601 = vmul.f32 %v599, %v90
    %v602 = vpack.c.bf16 %v601, %v600
    %s603 = scalar_lea.vmem [#allocation8], 128
    %v604 = vld [vmem:[%s603] sm:$0xf]
    %v605 = vld [vmem:[%s603 + $0x4] sm:$0xf]
    %v606 = vld [vmem:[%s603 + $0x8] sm:$0xf]
    %v607 = vld [vmem:[%s603 + $0xc] sm:$0xf]
    %v608 = vld [vmem:[%s603 + $0x10] sm:$0xf]
    %v609 = vld [vmem:[%s603 + $0x14] sm:$0xf]
    %v610 = vld [vmem:[%s603 + $0x18] sm:$0xf]
    %v611 = vld [vmem:[%s603 + $0x1c] sm:$0xf]
    %v612 = vld [vmem:[%s603 + $0x20] sm:$0xf]
    %v613 = vld [vmem:[%s603 + $0x24] sm:$0xf]
    %v614 = vld [vmem:[%s603 + $0x28] sm:$0xf]
    %v615 = vld [vmem:[%s603 + $0x2c] sm:$0xf]
    %v616 = vld [vmem:[%s603 + $0x30] sm:$0xf]
    %v617 = vld [vmem:[%s603 + $0x34] sm:$0xf]
    %v618 = vld [vmem:[%s603 + $0x38] sm:$0xf]
    %v619 = vld [vmem:[%s603 + $0x3c] sm:$0xf]
    %v620 = vld [vmem:[%s6 + $0x2] sm:$0x1]
    %v621 = vlaneseq
    %v622 = vshrl.u32 %v621, 7
    %v623 = vsub.s32 0, %v622
    %v624 = vrot.slane %v620, %v623
    %v641 = vunpack.c.l.b16 %v604
    %v642 = vunpack.c.l.b16 %v605
    %v643 = vunpack.c.l.b16 %v606
    %v644 = vunpack.c.l.b16 %v607
    %v645 = vunpack.c.l.b16 %v608
    %v646 = vunpack.c.l.b16 %v609
    %v647 = vunpack.c.l.b16 %v610
    %v648 = vunpack.c.l.b16 %v611
    %v649 = vunpack.c.l.b16 %v612
    %v650 = vunpack.c.l.b16 %v613
    %v651 = vunpack.c.l.b16 %v614
    %v652 = vunpack.c.l.b16 %v615
    %v653 = vunpack.c.l.b16 %v616
    %v654 = vunpack.c.l.b16 %v617
    %v655 = vunpack.c.l.b16 %v618
    %v656 = vunpack.c.l.b16 %v619
    %v657 = vpack.c.b16 %v642, %v641
    %v658 = vpack.c.b16 %v644, %v643
    %v659 = vpack.c.b16 %v646, %v645
    %v660 = vpack.c.b16 %v648, %v647
    %v661 = vpack.c.b16 %v650, %v649
    %v662 = vpack.c.b16 %v652, %v651
    %v663 = vpack.c.b16 %v654, %v653
    %v664 = vpack.c.b16 %v656, %v655
    %673 = vmatprep.subr.bf16.mxu0 0
    %674 = vmatpush1.bf16.msra.mxu0 %v664
    %675 = vmatprep.subr.bf16.mxu0 0
    %676 = vmatpush1.bf16.msra.mxu0 %v663
    %677 = vmatprep.subr.bf16.mxu0 0
    %678 = vmatpush1.bf16.msra.mxu0 %v662
    %679 = vmatprep.subr.bf16.mxu0 0
    %680 = vmatpush1.bf16.msra.mxu0 %v661
    %681 = vmatprep.subr.bf16.mxu0 0
    %682 = vmatpush1.bf16.msra.mxu0 %v660
    %683 = vmatprep.subr.bf16.mxu0 0
    %684 = vmatpush1.bf16.msra.mxu0 %v659
    %685 = vmatprep.subr.bf16.mxu0 0
    %686 = vmatpush1.bf16.msra.mxu0 %v658
    %687 = vmatprep.subr.bf16.mxu0 0
    %688 = vmatpush1.bf16.msra.mxu0 %v657
    %689 = vmatprep.subr.bf16.mxu0 0
    %690 = vmatpush2.bf16.msra.mxu0 0
    %691 = vmatprep.subr.bf16.mxu0 0
    %692 = vmatpush2.bf16.msra.mxu0 0
    %693 = vmatprep.subr.bf16.mxu0 0
    %694 = vmatpush2.bf16.msra.mxu0 0
    %695 = vmatprep.subr.bf16.mxu0 0
    %696 = vmatpush2.bf16.msra.mxu0 0
    %697 = vmatprep.subr.bf16.mxu0 0
    %698 = vmatpush2.bf16.msra.mxu0 0
    %699 = vmatprep.subr.bf16.mxu0 0
    %700 = vmatpush2.bf16.msra.mxu0 0
    %701 = vmatprep.subr.bf16.mxu0 0
    %702 = vmatpush2.bf16.msra.mxu0 0
    %703 = vmatprep.subr.bf16.mxu0 0
    %704 = vmatpush2.bf16.msra.mxu0 0
    %705 = vmatprep.mubr.bf16.mxu0 0
    %706 = vmatmul.mubr.bf16.gmra.mxu0 %v602
    %v707 = vpop.f32.mrf.mxu0
    %v708 = vadd.f32 %v624, %v707
    %v709 = vpop.f32.mrf.mxu0
    %v710 = vpop.f32.mrf.mxu0
    %v711 = vadd.f32 %v624, %v710
    %v712 = vpop.f32.mrf.mxu0
    %713 = vdwg.mxu0
    %v714 = vld [vmem:[#allocation5] sm:$0xf]
    %v715 = vld [vmem:[#allocation5 + $0x4] sm:$0xf]
    %v716 = vld [vmem:[#allocation5 + $0x8] sm:$0xf]
    %v717 = vld [vmem:[#allocation5 + $0xc] sm:$0xf]
    %v718 = vld [vmem:[#allocation5 + $0x10] sm:$0xf]
    %v719 = vld [vmem:[#allocation5 + $0x14] sm:$0xf]
    %v720 = vld [vmem:[#allocation5 + $0x18] sm:$0xf]
    %v721 = vld [vmem:[#allocation5 + $0x1c] sm:$0xf]
    %v722 = vld [vmem:[#allocation5 + $0x20] sm:$0xf]
    %v723 = vld [vmem:[#allocation5 + $0x24] sm:$0xf]
    %v724 = vld [vmem:[#allocation5 + $0x28] sm:$0xf]
    %v725 = vld [vmem:[#allocation5 + $0x2c] sm:$0xf]
    %v726 = vld [vmem:[#allocation5 + $0x30] sm:$0xf]
    %v727 = vld [vmem:[#allocation5 + $0x34] sm:$0xf]
    %v728 = vld [vmem:[#allocation5 + $0x38] sm:$0xf]
    %v729 = vld [vmem:[#allocation5 + $0x3c] sm:$0xf]
    %v730 = vld [vmem:[#allocation5 + $0x40] sm:$0xf]
    %v731 = vld [vmem:[#allocation5 + $0x44] sm:$0xf]
    %v732 = vld [vmem:[#allocation5 + $0x48] sm:$0xf]
    %v733 = vld [vmem:[#allocation5 + $0x4c] sm:$0xf]
    %v734 = vld [vmem:[#allocation5 + $0x50] sm:$0xf]
    %v735 = vld [vmem:[#allocation5 + $0x54] sm:$0xf]
    %v736 = vld [vmem:[#allocation5 + $0x58] sm:$0xf]
    %v737 = vld [vmem:[#allocation5 + $0x5c] sm:$0xf]
    %v738 = vld [vmem:[#allocation5 + $0x60] sm:$0xf]
    %v739 = vld [vmem:[#allocation5 + $0x64] sm:$0xf]
    %v740 = vld [vmem:[#allocation5 + $0x68] sm:$0xf]
    %v741 = vld [vmem:[#allocation5 + $0x6c] sm:$0xf]
    %v742 = vld [vmem:[#allocation5 + $0x70] sm:$0xf]
    %v743 = vld [vmem:[#allocation5 + $0x74] sm:$0xf]
    %v744 = vld [vmem:[#allocation5 + $0x78] sm:$0xf]
    %v745 = vld [vmem:[#allocation5 + $0x7c] sm:$0xf]
    %v746 = vunpack.c.l.bf16 %v714
    %v747 = vunpack.c.l.bf16 %v715
    %v748 = vunpack.c.l.bf16 %v716
    %v749 = vunpack.c.l.bf16 %v717
    %v750 = vunpack.c.l.bf16 %v718
    %v751 = vunpack.c.l.bf16 %v719
    %v752 = vunpack.c.l.bf16 %v720
    %v753 = vunpack.c.l.bf16 %v721
    %v754 = vunpack.c.l.bf16 %v722
    %v755 = vunpack.c.l.bf16 %v723
    %v756 = vunpack.c.l.bf16 %v724
    %v757 = vunpack.c.l.bf16 %v725
    %v758 = vunpack.c.l.bf16 %v726
    %v759 = vunpack.c.l.bf16 %v727
    %v760 = vunpack.c.l.bf16 %v728
    %v761 = vunpack.c.l.bf16 %v729
    %v762 = vunpack.c.l.bf16 %v730
    %v763 = vunpack.c.l.bf16 %v731
    %v764 = vunpack.c.l.bf16 %v732
    %v765 = vunpack.c.l.bf16 %v733
    %v766 = vunpack.c.l.bf16 %v734
    %v767 = vunpack.c.l.bf16 %v735
    %v768 = vunpack.c.l.bf16 %v736
    %v769 = vunpack.c.l.bf16 %v737
    %v770 = vunpack.c.l.bf16 %v738
    %v771 = vunpack.c.l.bf16 %v739
    %v772 = vunpack.c.l.bf16 %v740
    %v773 = vunpack.c.l.bf16 %v741
    %v774 = vunpack.c.l.bf16 %v742
    %v775 = vunpack.c.l.bf16 %v743
    %v776 = vunpack.c.l.bf16 %v744
    %v777 = vunpack.c.l.bf16 %v745
    %v780 = vcombine.high %v708, %v708
    %v782 = vunpack.c.l.s4 1966171168
    %v783 = vunpack.c.0.s8 %v782
    %v784 = vlaneseq
    %v785 = vshrl.u32 %v784, 7
    %v786 = vsub.s32 %v783, %v785
    %v787 = vrot.slane %v708, %v786
    %v789 = vunpack.c.l.s4 1966171168
    %v790 = vunpack.c.0.s8 %v789
    %v791 = vlaneseq
    %v792 = vshrl.u32 %v791, 7
    %v793 = vsub.s32 %v790, %v792
    %v794 = vrot.slane %v780, %v793
    %v795 = vcombine.high %v787, %v787
    %v796 = vcombine.high %v794, %v794
    %v798 = vunpack.c.l.s4 1966171168
    %v799 = vunpack.c.0.s8 %v798
    %v800 = vlaneseq
    %v801 = vshrl.u32 %v800, 7
    %v802 = vsub.s32 %v799, %v801
    %v803 = vrot.slane %v787, %v802
    %v805 = vunpack.c.l.s4 1966171168
    %v806 = vunpack.c.0.s8 %v805
    %v807 = vlaneseq
    %v808 = vshrl.u32 %v807, 7
    %v809 = vsub.s32 %v806, %v808
    %v810 = vrot.slane %v794, %v809
    %v812 = vunpack.c.l.s4 1966171168
    %v813 = vunpack.c.0.s8 %v812
    %v814 = vlaneseq
    %v815 = vshrl.u32 %v814, 7
    %v816 = vsub.s32 %v813, %v815
    %v817 = vrot.slane %v795, %v816
    %v819 = vunpack.c.l.s4 1966171168
    %v820 = vunpack.c.0.s8 %v819
    %v821 = vlaneseq
    %v822 = vshrl.u32 %v821, 7
    %v823 = vsub.s32 %v820, %v822
    %v824 = vrot.slane %v796, %v823
    %v825 = vcombine.high %v803, %v803
    %v826 = vcombine.high %v810, %v810
    %v827 = vcombine.high %v817, %v817
    %v828 = vcombine.high %v824, %v824
    %v829 = vcombine.high %v711, %v711
    %v831 = vunpack.c.l.s4 1966171168
    %v832 = vunpack.c.0.s8 %v831
    %v833 = vlaneseq
    %v834 = vshrl.u32 %v833, 7
    %v835 = vsub.s32 %v832, %v834
    %v836 = vrot.slane %v711, %v835
    %v838 = vunpack.c.l.s4 1966171168
    %v839 = vunpack.c.0.s8 %v838
    %v840 = vlaneseq
    %v841 = vshrl.u32 %v840, 7
    %v842 = vsub.s32 %v839, %v841
    %v843 = vrot.slane %v829, %v842
    %v844 = vcombine.high %v836, %v836
    %v845 = vcombine.high %v843, %v843
    %v847 = vunpack.c.l.s4 1966171168
    %v848 = vunpack.c.0.s8 %v847
    %v849 = vlaneseq
    %v850 = vshrl.u32 %v849, 7
    %v851 = vsub.s32 %v848, %v850
    %v852 = vrot.slane %v836, %v851
    %v854 = vunpack.c.l.s4 1966171168
    %v855 = vunpack.c.0.s8 %v854
    %v856 = vlaneseq
    %v857 = vshrl.u32 %v856, 7
    %v858 = vsub.s32 %v855, %v857
    %v859 = vrot.slane %v843, %v858
    %v861 = vunpack.c.l.s4 1966171168
    %v862 = vunpack.c.0.s8 %v861
    %v863 = vlaneseq
    %v864 = vshrl.u32 %v863, 7
    %v865 = vsub.s32 %v862, %v864
    %v866 = vrot.slane %v844, %v865
    %v868 = vunpack.c.l.s4 1966171168
    %v869 = vunpack.c.0.s8 %v868
    %v870 = vlaneseq
    %v871 = vshrl.u32 %v870, 7
    %v872 = vsub.s32 %v869, %v871
    %v873 = vrot.slane %v845, %v872
    %v874 = vcombine.high %v852, %v852
    %v875 = vcombine.high %v859, %v859
    %v876 = vcombine.high %v866, %v866
    %v877 = vcombine.high %v873, %v873
    %v878 = vlaneseq
    %v879 = vshrl.u32 %v878, 7
    %v880 = vsub.s32 0, %v879
    %v881 = vrot.slane %v803, %v880
    %v882 = vlaneseq
    %v883 = vshrl.u32 %v882, 7
    %v884 = vsub.s32 0, %v883
    %v885 = vrot.slane %v817, %v884
    %v886 = vlaneseq
    %v887 = vshrl.u32 %v886, 7
    %v888 = vsub.s32 0, %v887
    %v889 = vrot.slane %v825, %v888
    %v890 = vlaneseq
    %v891 = vshrl.u32 %v890, 7
    %v892 = vsub.s32 0, %v891
    %v893 = vrot.slane %v827, %v892
    %v894 = vlaneseq
    %v895 = vshrl.u32 %v894, 7
    %v896 = vsub.s32 0, %v895
    %v897 = vrot.slane %v810, %v896
    %v898 = vlaneseq
    %v899 = vshrl.u32 %v898, 7
    %v900 = vsub.s32 0, %v899
    %v901 = vrot.slane %v824, %v900
    %v902 = vlaneseq
    %v903 = vshrl.u32 %v902, 7
    %v904 = vsub.s32 0, %v903
    %v905 = vrot.slane %v826, %v904
    %v906 = vlaneseq
    %v907 = vshrl.u32 %v906, 7
    %v908 = vsub.s32 0, %v907
    %v909 = vrot.slane %v828, %v908
    %v910 = vlaneseq
    %v911 = vshrl.u32 %v910, 7
    %v912 = vsub.s32 0, %v911
    %v913 = vrot.slane %v852, %v912
    %v914 = vlaneseq
    %v915 = vshrl.u32 %v914, 7
    %v916 = vsub.s32 0, %v915
    %v917 = vrot.slane %v866, %v916
    %v918 = vlaneseq
    %v919 = vshrl.u32 %v918, 7
    %v920 = vsub.s32 0, %v919
    %v921 = vrot.slane %v874, %v920
    %v922 = vlaneseq
    %v923 = vshrl.u32 %v922, 7
    %v924 = vsub.s32 0, %v923
    %v925 = vrot.slane %v876, %v924
    %v926 = vlaneseq
    %v927 = vshrl.u32 %v926, 7
    %v928 = vsub.s32 0, %v927
    %v929 = vrot.slane %v859, %v928
    %v930 = vlaneseq
    %v931 = vshrl.u32 %v930, 7
    %v932 = vsub.s32 0, %v931
    %v933 = vrot.slane %v873, %v932
    %v934 = vlaneseq
    %v935 = vshrl.u32 %v934, 7
    %v936 = vsub.s32 0, %v935
    %v937 = vrot.slane %v875, %v936
    %v938 = vlaneseq
    %v939 = vshrl.u32 %v938, 7
    %v940 = vsub.s32 0, %v939
    %v941 = vrot.slane %v877, %v940
    %v958 = vadd.f32 %v746, %v881
    %v959 = vadd.f32 %v747, %v881
    %v960 = vadd.f32 %v748, %v885
    %v961 = vadd.f32 %v749, %v885
    %v962 = vadd.f32 %v750, %v889
    %v963 = vadd.f32 %v751, %v889
    %v964 = vadd.f32 %v752, %v893
    %v965 = vadd.f32 %v753, %v893
    %v966 = vadd.f32 %v754, %v897
    %v967 = vadd.f32 %v755, %v897
    %v968 = vadd.f32 %v756, %v901
    %v969 = vadd.f32 %v757, %v901
    %v970 = vadd.f32 %v758, %v905
    %v971 = vadd.f32 %v759, %v905
    %v972 = vadd.f32 %v760, %v909
    %v973 = vadd.f32 %v761, %v909
    %v974 = vadd.f32 %v762, %v913
    %v975 = vadd.f32 %v763, %v913
    %v976 = vadd.f32 %v764, %v917
    %v977 = vadd.f32 %v765, %v917
    %v978 = vadd.f32 %v766, %v921
    %v979 = vadd.f32 %v767, %v921
    %v980 = vadd.f32 %v768, %v925
    %v981 = vadd.f32 %v769, %v925
    %v982 = vadd.f32 %v770, %v929
    %v983 = vadd.f32 %v771, %v929
    %v984 = vadd.f32 %v772, %v933
    %v985 = vadd.f32 %v773, %v933
    %v986 = vadd.f32 %v774, %v937
    %v987 = vadd.f32 %v775, %v937
    %v988 = vadd.f32 %v776, %v941
    %v989 = vadd.f32 %v777, %v941
    %v990 = vtanh.pop %v958
    %v991 = vtanh.pop %v959
    %v992 = vtanh.pop %v960
    %v993 = vtanh.pop %v961
    %v994 = vtanh.pop %v962
    %v995 = vtanh.pop %v963
    %v996 = vtanh.pop %v964
    %v997 = vtanh.pop %v965
    %v998 = vtanh.pop %v966
    %v999 = vtanh.pop %v967
    %v1000 = vtanh.pop %v968
    %v1001 = vtanh.pop %v969
    %v1002 = vtanh.pop %v970
    %v1003 = vtanh.pop %v971
    %v1004 = vtanh.pop %v972
    %v1005 = vtanh.pop %v973
    %v1006 = vtanh.pop %v974
    %v1007 = vtanh.pop %v975
    %v1008 = vtanh.pop %v976
    %v1009 = vtanh.pop %v977
    %v1010 = vtanh.pop %v978
    %v1011 = vtanh.pop %v979
    %v1012 = vtanh.pop %v980
    %v1013 = vtanh.pop %v981
    %v1014 = vtanh.pop %v982
    %v1015 = vtanh.pop %v983
    %v1016 = vtanh.pop %v984
    %v1017 = vtanh.pop %v985
    %v1018 = vtanh.pop %v986
    %v1019 = vtanh.pop %v987
    %v1020 = vtanh.pop %v988
    %v1021 = vtanh.pop %v989
    %v1022 = vld [vmem:[%s6 + $0x5] sm:$0x1]
    %v1023 = vlaneseq
    %v1024 = vshrl.u32 %v1023, 7
    %v1025 = vsub.s32 0, %v1024
    %v1026 = vrot.slane %v1022, %v1025
    %v1027 = vmul.f32 %v990, %v1026
    %v1028 = vmul.f32 %v991, %v1026
    %v1029 = vmul.f32 %v992, %v1026
    %v1030 = vmul.f32 %v993, %v1026
    %v1031 = vmul.f32 %v994, %v1026
    %v1032 = vmul.f32 %v995, %v1026
    %v1033 = vmul.f32 %v996, %v1026
    %v1034 = vmul.f32 %v997, %v1026
    %v1035 = vmul.f32 %v998, %v1026
    %v1036 = vmul.f32 %v999, %v1026
    %v1037 = vmul.f32 %v1000, %v1026
    %v1038 = vmul.f32 %v1001, %v1026
    %v1039 = vmul.f32 %v1002, %v1026
    %v1040 = vmul.f32 %v1003, %v1026
    %v1041 = vmul.f32 %v1004, %v1026
    %v1042 = vmul.f32 %v1005, %v1026
    %v1043 = vmul.f32 %v1006, %v1026
    %v1044 = vmul.f32 %v1007, %v1026
    %v1045 = vmul.f32 %v1008, %v1026
    %v1046 = vmul.f32 %v1009, %v1026
    %v1047 = vmul.f32 %v1010, %v1026
    %v1048 = vmul.f32 %v1011, %v1026
    %v1049 = vmul.f32 %v1012, %v1026
    %v1050 = vmul.f32 %v1013, %v1026
    %v1051 = vmul.f32 %v1014, %v1026
    %v1052 = vmul.f32 %v1015, %v1026
    %v1053 = vmul.f32 %v1016, %v1026
    %v1054 = vmul.f32 %v1017, %v1026
    %v1055 = vmul.f32 %v1018, %v1026
    %v1056 = vmul.f32 %v1019, %v1026
    %v1057 = vmul.f32 %v1020, %v1026
    %v1058 = vmul.f32 %v1021, %v1026
    %1059 = vadd.xlane.f32.xlu0 %v1027
    %v1060 = vpop.xlane.xlu0 %1059
    %1061 = vadd.xlane.f32.xlu0 %v1028
    %v1062 = vpop.xlane.xlu0 %1061
    %1063 = vadd.xlane.f32.xlu0 %v1029
    %v1064 = vpop.xlane.xlu0 %1063
    %1065 = vadd.xlane.f32.xlu0 %v1030
    %v1066 = vpop.xlane.xlu0 %1065
    %1067 = vadd.xlane.f32.xlu0 %v1031
    %v1068 = vpop.xlane.xlu0 %1067
    %1069 = vadd.xlane.f32.xlu0 %v1032
    %v1070 = vpop.xlane.xlu0 %1069
    %1071 = vadd.xlane.f32.xlu0 %v1033
    %v1072 = vpop.xlane.xlu0 %1071
    %1073 = vadd.xlane.f32.xlu0 %v1034
    %v1074 = vpop.xlane.xlu0 %1073
    %1075 = vadd.xlane.f32.xlu0 %v1035
    %v1076 = vpop.xlane.xlu0 %1075
    %1077 = vadd.xlane.f32.xlu0 %v1036
    %v1078 = vpop.xlane.xlu0 %1077
    %1079 = vadd.xlane.f32.xlu0 %v1037
    %v1080 = vpop.xlane.xlu0 %1079
    %1081 = vadd.xlane.f32.xlu0 %v1038
    %v1082 = vpop.xlane.xlu0 %1081
    %1083 = vadd.xlane.f32.xlu0 %v1039
    %v1084 = vpop.xlane.xlu0 %1083
    %1085 = vadd.xlane.f32.xlu0 %v1040
    %v1086 = vpop.xlane.xlu0 %1085
    %1087 = vadd.xlane.f32.xlu0 %v1041
    %v1088 = vpop.xlane.xlu0 %1087
    %1089 = vadd.xlane.f32.xlu0 %v1042
    %v1090 = vpop.xlane.xlu0 %1089
    %1091 = vadd.xlane.f32.xlu0 %v1043
    %v1092 = vpop.xlane.xlu0 %1091
    %1093 = vadd.xlane.f32.xlu0 %v1044
    %v1094 = vpop.xlane.xlu0 %1093
    %1095 = vadd.xlane.f32.xlu0 %v1045
    %v1096 = vpop.xlane.xlu0 %1095
    %1097 = vadd.xlane.f32.xlu0 %v1046
    %v1098 = vpop.xlane.xlu0 %1097
    %1099 = vadd.xlane.f32.xlu0 %v1047
    %v1100 = vpop.xlane.xlu0 %1099
    %1101 = vadd.xlane.f32.xlu0 %v1048
    %v1102 = vpop.xlane.xlu0 %1101
    %1103 = vadd.xlane.f32.xlu0 %v1049
    %v1104 = vpop.xlane.xlu0 %1103
    %1105 = vadd.xlane.f32.xlu0 %v1050
    %v1106 = vpop.xlane.xlu0 %1105
    %1107 = vadd.xlane.f32.xlu0 %v1051
    %v1108 = vpop.xlane.xlu0 %1107
    %1109 = vadd.xlane.f32.xlu0 %v1052
    %v1110 = vpop.xlane.xlu0 %1109
    %1111 = vadd.xlane.f32.xlu0 %v1053
    %v1112 = vpop.xlane.xlu0 %1111
    %1113 = vadd.xlane.f32.xlu0 %v1054
    %v1114 = vpop.xlane.xlu0 %1113
    %1115 = vadd.xlane.f32.xlu0 %v1055
    %v1116 = vpop.xlane.xlu0 %1115
    %1117 = vadd.xlane.f32.xlu0 %v1056
    %v1118 = vpop.xlane.xlu0 %1117
    %1119 = vadd.xlane.f32.xlu0 %v1057
    %v1120 = vpop.xlane.xlu0 %1119
    %1121 = vadd.xlane.f32.xlu0 %v1058
    %v1122 = vpop.xlane.xlu0 %1121
    %v1123 = vld [vmem:[%s4] sm:$0xff]
    %v1124 = vld [vmem:[%s4 + $0x8] sm:$0xff]
    %1125 = vset.pattern.permute.xlu0 0
    %1126 = vperm.xlu0 %1125, %v1123
    %v1127 = vpop.permute.xlu0 %1126
    %1128 = vset.pattern.permute.xlu0 0
    %1129 = vperm.xlu0 %1128, %v1124
    %v1130 = vpop.permute.xlu0 %1129
    %vm1131 = vcmp.lt.s32.totalorder %v87, %v1127
    %vm1132 = vcmp.lt.s32.totalorder %v87, %v1130
    %v1165 = vlaneseq
    %v1166 = vshrl.u32 %v1165, 7
    %v1167 = vsub.s32 %v87, %v1166
    %v1168 = vrot.slane %v1060, %v1167
    %v1169 = vadd.s32 %v87, 4294967288
    %v1170 = vlaneseq
    %v1171 = vshrl.u32 %v1170, 7
    %v1172 = vsub.s32 %v1169, %v1171
    %v1173 = vrot.slane %v1062, %v1172
    %vm1174 = vcmask 130112
    %v1175 = vsel %vm1174, %v1173, %v1168
    %v1176 = vlaneseq
    %v1177 = vshrl.u32 %v1176, 7
    %v1178 = vsub.s32 %v87, %v1177
    %v1179 = vrot.slane %v1064, %v1178
    %v1180 = vlaneseq
    %v1181 = vshrl.u32 %v1180, 7
    %v1182 = vsub.s32 %v1169, %v1181
    %v1183 = vrot.slane %v1066, %v1182
    %v1184 = vsel %vm1174, %v1183, %v1179
    %v1185 = vlaneseq
    %v1186 = vshrl.u32 %v1185, 7
    %v1187 = vsub.s32 %v87, %v1186
    %v1188 = vrot.slane %v1068, %v1187
    %v1189 = vlaneseq
    %v1190 = vshrl.u32 %v1189, 7
    %v1191 = vsub.s32 %v1169, %v1190
    %v1192 = vrot.slane %v1070, %v1191
    %v1193 = vsel %vm1174, %v1192, %v1188
    %v1194 = vlaneseq
    %v1195 = vshrl.u32 %v1194, 7
    %v1196 = vsub.s32 %v87, %v1195
    %v1197 = vrot.slane %v1072, %v1196
    %v1198 = vlaneseq
    %v1199 = vshrl.u32 %v1198, 7
    %v1200 = vsub.s32 %v1169, %v1199
    %v1201 = vrot.slane %v1074, %v1200
    %v1202 = vsel %vm1174, %v1201, %v1197
    %v1203 = vlaneseq
    %v1204 = vshrl.u32 %v1203, 7
    %v1205 = vsub.s32 %v87, %v1204
    %v1206 = vrot.slane %v1076, %v1205
    %v1207 = vlaneseq
    %v1208 = vshrl.u32 %v1207, 7
    %v1209 = vsub.s32 %v1169, %v1208
    %v1210 = vrot.slane %v1078, %v1209
    %v1211 = vsel %vm1174, %v1210, %v1206
    %v1212 = vlaneseq
    %v1213 = vshrl.u32 %v1212, 7
    %v1214 = vsub.s32 %v87, %v1213
    %v1215 = vrot.slane %v1080, %v1214
    %v1216 = vlaneseq
    %v1217 = vshrl.u32 %v1216, 7
    %v1218 = vsub.s32 %v1169, %v1217
    %v1219 = vrot.slane %v1082, %v1218
    %v1220 = vsel %vm1174, %v1219, %v1215
    %v1221 = vlaneseq
    %v1222 = vshrl.u32 %v1221, 7
    %v1223 = vsub.s32 %v87, %v1222
    %v1224 = vrot.slane %v1084, %v1223
    %v1225 = vlaneseq
    %v1226 = vshrl.u32 %v1225, 7
    %v1227 = vsub.s32 %v1169, %v1226
    %v1228 = vrot.slane %v1086, %v1227
    %v1229 = vsel %vm1174, %v1228, %v1224
    %v1230 = vlaneseq
    %v1231 = vshrl.u32 %v1230, 7
    %v1232 = vsub.s32 %v87, %v1231
    %v1233 = vrot.slane %v1088, %v1232
    %v1234 = vlaneseq
    %v1235 = vshrl.u32 %v1234, 7
    %v1236 = vsub.s32 %v1169, %v1235
    %v1237 = vrot.slane %v1090, %v1236
    %v1238 = vsel %vm1174, %v1237, %v1233
    %v1239 = vlaneseq
    %v1240 = vshrl.u32 %v1239, 7
    %v1241 = vsub.s32 %v87, %v1240
    %v1242 = vrot.slane %v1092, %v1241
    %v1243 = vlaneseq
    %v1244 = vshrl.u32 %v1243, 7
    %v1245 = vsub.s32 %v1169, %v1244
    %v1246 = vrot.slane %v1094, %v1245
    %v1247 = vsel %vm1174, %v1246, %v1242
    %v1248 = vlaneseq
    %v1249 = vshrl.u32 %v1248, 7
    %v1250 = vsub.s32 %v87, %v1249
    %v1251 = vrot.slane %v1096, %v1250
    %v1252 = vlaneseq
    %v1253 = vshrl.u32 %v1252, 7
    %v1254 = vsub.s32 %v1169, %v1253
    %v1255 = vrot.slane %v1098, %v1254
    %v1256 = vsel %vm1174, %v1255, %v1251
    %v1257 = vlaneseq
    %v1258 = vshrl.u32 %v1257, 7
    %v1259 = vsub.s32 %v87, %v1258
    %v1260 = vrot.slane %v1100, %v1259
    %v1261 = vlaneseq
    %v1262 = vshrl.u32 %v1261, 7
    %v1263 = vsub.s32 %v1169, %v1262
    %v1264 = vrot.slane %v1102, %v1263
    %v1265 = vsel %vm1174, %v1264, %v1260
    %v1266 = vlaneseq
    %v1267 = vshrl.u32 %v1266, 7
    %v1268 = vsub.s32 %v87, %v1267
    %v1269 = vrot.slane %v1104, %v1268
    %v1270 = vlaneseq
    %v1271 = vshrl.u32 %v1270, 7
    %v1272 = vsub.s32 %v1169, %v1271
    %v1273 = vrot.slane %v1106, %v1272
    %v1274 = vsel %vm1174, %v1273, %v1269
    %v1275 = vlaneseq
    %v1276 = vshrl.u32 %v1275, 7
    %v1277 = vsub.s32 %v87, %v1276
    %v1278 = vrot.slane %v1108, %v1277
    %v1279 = vlaneseq
    %v1280 = vshrl.u32 %v1279, 7
    %v1281 = vsub.s32 %v1169, %v1280
    %v1282 = vrot.slane %v1110, %v1281
    %v1283 = vsel %vm1174, %v1282, %v1278
    %v1284 = vlaneseq
    %v1285 = vshrl.u32 %v1284, 7
    %v1286 = vsub.s32 %v87, %v1285
    %v1287 = vrot.slane %v1112, %v1286
    %v1288 = vlaneseq
    %v1289 = vshrl.u32 %v1288, 7
    %v1290 = vsub.s32 %v1169, %v1289
    %v1291 = vrot.slane %v1114, %v1290
    %v1292 = vsel %vm1174, %v1291, %v1287
    %v1293 = vlaneseq
    %v1294 = vshrl.u32 %v1293, 7
    %v1295 = vsub.s32 %v87, %v1294
    %v1296 = vrot.slane %v1116, %v1295
    %v1297 = vlaneseq
    %v1298 = vshrl.u32 %v1297, 7
    %v1299 = vsub.s32 %v1169, %v1298
    %v1300 = vrot.slane %v1118, %v1299
    %v1301 = vsel %vm1174, %v1300, %v1296
    %v1302 = vlaneseq
    %v1303 = vshrl.u32 %v1302, 7
    %v1304 = vsub.s32 %v87, %v1303
    %v1305 = vrot.slane %v1120, %v1304
    %v1306 = vlaneseq
    %v1307 = vshrl.u32 %v1306, 7
    %v1308 = vsub.s32 %v1169, %v1307
    %v1309 = vrot.slane %v1122, %v1308
    %v1310 = vsel %vm1174, %v1309, %v1305
    %vm1311 = vcmask 1041409
    %v1312 = vsel %vm1311, %v1184, %v1175
    %vm1313 = vcmask 1042434
    %v1314 = vsel %vm1313, %v1193, %v1312
    %vm1315 = vcmask 1043459
    %v1316 = vsel %vm1315, %v1202, %v1314
    %vm1317 = vcmask 1044484
    %v1318 = vsel %vm1317, %v1211, %v1316
    %vm1319 = vcmask 1045509
    %v1320 = vsel %vm1319, %v1220, %v1318
    %vm1321 = vcmask 1046534
    %v1322 = vsel %vm1321, %v1229, %v1320
    %vm1323 = vcmask 1047559
    %v1324 = vsel %vm1323, %v1238, %v1322
    %v1325 = vsel %vm1311, %v1256, %v1247
    %v1326 = vsel %vm1313, %v1265, %v1325
    %v1327 = vsel %vm1315, %v1274, %v1326
    %v1328 = vsel %vm1317, %v1283, %v1327
    %v1329 = vsel %vm1319, %v1292, %v1328
    %v1330 = vsel %vm1321, %v1301, %v1329
    %v1331 = vsel %vm1323, %v1310, %v1330
    %v1334 = vsel %vm1131, %v1324, -1e+30
    %v1335 = vsel %vm1132, %v1331, -1e+30
    %vm1336 = vcmask 130048
    %v1337 = vsel %vm1336, %v1334, -inf
    %1338 = vmax.xlane.f32.xlu0 %v1337
    %v1339 = vpop.xlane.xlu0 %1338
    %v1340 = vsel %vm1336, %v1335, -inf
    %1341 = vmax.xlane.f32.xlu0 %v1340
    %v1342 = vpop.xlane.xlu0 %1341
    %v1343 = vsub.f32 %v1334, %v1339
    %v1344 = vsub.f32 %v1335, %v1342
    %v1345 = vmul.f32 %v1343, 1.442695
    %v1346 = vpow.pop %v1345
    %v1347 = vmul.f32 %v1344, 1.442695
    %v1348 = vpow.pop %v1347
    %v1349 = vsel %vm1131, 1, 0
    %v1350 = vsel %vm1132, 1, 0
    %v1351 = vcvt.s32.f32 %v1349
    %v1352 = vcvt.s32.f32 %v1350
    %v1353 = vmul.f32 %v1346, %v1351
    %v1354 = vmul.f32 %v1348, %v1352
    %v1355 = vsel %vm1336, %v1353, 0.0
    %1356 = vadd.xlane.f32.xlu0 %v1355
    %v1357 = vpop.xlane.xlu0 %1356
    %v1358 = vsel %vm1336, %v1354, 0.0
    %1359 = vadd.xlane.f32.xlu0 %v1358
    %v1360 = vpop.xlane.xlu0 %1359
    %v1361 = vmax.f32 %v1357, 1e-12
    %v1362 = vmax.f32 %v1360, 1e-12
    %v1363 = vrcp.pop %v1361
    %v1364 = vmul.f32 %v1353, %v1363
    %v1365 = vrcp.pop %v1362
    %v1366 = vmul.f32 %v1354, %v1365
    %v1367 = vlaneseq
    %v1368 = vshrl.u32 %v1367, 7
    %v1369 = vsub.s32 0, %v1368
    %v1370 = vrot.slane %v1364, %v1369
    %1372 = vbcast.lane.b32.xlu0 %v1370, 256
    %v1373 = vpop.permute.xlu0 %1372
    %s1375 = sor.u32 256, 8
    %1376 = vbcast.lane.b32.xlu0 %v1370, %s1375
    %v1377 = vpop.permute.xlu0 %1376
    %v1378 = vlaneseq
    %v1379 = vshrl.u32 %v1378, 7
    %v1380 = vsub.s32 1, %v1379
    %v1381 = vrot.slane %v1364, %v1380
    %1383 = vbcast.lane.b32.xlu0 %v1381, 256
    %v1384 = vpop.permute.xlu0 %1383
    %s1386 = sor.u32 256, 8
    %1387 = vbcast.lane.b32.xlu0 %v1381, %s1386
    %v1388 = vpop.permute.xlu0 %1387
    %v1389 = vlaneseq
    %v1390 = vshrl.u32 %v1389, 7
    %v1391 = vsub.s32 2, %v1390
    %v1392 = vrot.slane %v1364, %v1391
    %1394 = vbcast.lane.b32.xlu0 %v1392, 256
    %v1395 = vpop.permute.xlu0 %1394
    %s1397 = sor.u32 256, 8
    %1398 = vbcast.lane.b32.xlu0 %v1392, %s1397
    %v1399 = vpop.permute.xlu0 %1398
    %v1400 = vlaneseq
    %v1401 = vshrl.u32 %v1400, 7
    %v1402 = vsub.s32 3, %v1401
    %v1403 = vrot.slane %v1364, %v1402
    %1405 = vbcast.lane.b32.xlu0 %v1403, 256
    %v1406 = vpop.permute.xlu0 %1405
    %s1408 = sor.u32 256, 8
    %1409 = vbcast.lane.b32.xlu0 %v1403, %s1408
    %v1410 = vpop.permute.xlu0 %1409
    %v1411 = vlaneseq
    %v1412 = vshrl.u32 %v1411, 7
    %v1413 = vsub.s32 4, %v1412
    %v1414 = vrot.slane %v1364, %v1413
    %1416 = vbcast.lane.b32.xlu0 %v1414, 256
    %v1417 = vpop.permute.xlu0 %1416
    %s1419 = sor.u32 256, 8
    %1420 = vbcast.lane.b32.xlu0 %v1414, %s1419
    %v1421 = vpop.permute.xlu0 %1420
    %v1422 = vlaneseq
    %v1423 = vshrl.u32 %v1422, 7
    %v1424 = vsub.s32 5, %v1423
    %v1425 = vrot.slane %v1364, %v1424
    %1427 = vbcast.lane.b32.xlu0 %v1425, 256
    %v1428 = vpop.permute.xlu0 %1427
    %s1430 = sor.u32 256, 8
    %1431 = vbcast.lane.b32.xlu0 %v1425, %s1430
    %v1432 = vpop.permute.xlu0 %1431
    %v1433 = vlaneseq
    %v1434 = vshrl.u32 %v1433, 7
    %v1435 = vsub.s32 6, %v1434
    %v1436 = vrot.slane %v1364, %v1435
    %1438 = vbcast.lane.b32.xlu0 %v1436, 256
    %v1439 = vpop.permute.xlu0 %1438
    %s1441 = sor.u32 256, 8
    %1442 = vbcast.lane.b32.xlu0 %v1436, %s1441
    %v1443 = vpop.permute.xlu0 %1442
    %v1444 = vlaneseq
    %v1445 = vshrl.u32 %v1444, 7
    %v1446 = vsub.s32 7, %v1445
    %v1447 = vrot.slane %v1364, %v1446
    %1449 = vbcast.lane.b32.xlu0 %v1447, 256
    %v1450 = vpop.permute.xlu0 %1449
    %s1452 = sor.u32 256, 8
    %1453 = vbcast.lane.b32.xlu0 %v1447, %s1452
    %v1454 = vpop.permute.xlu0 %1453
    %v1455 = vlaneseq
    %v1456 = vshrl.u32 %v1455, 7
    %v1457 = vsub.s32 0, %v1456
    %v1458 = vrot.slane %v1366, %v1457
    %1460 = vbcast.lane.b32.xlu0 %v1458, 256
    %v1461 = vpop.permute.xlu0 %1460
    %s1463 = sor.u32 256, 8
    %1464 = vbcast.lane.b32.xlu0 %v1458, %s1463
    %v1465 = vpop.permute.xlu0 %1464
    %v1466 = vlaneseq
    %v1467 = vshrl.u32 %v1466, 7
    %v1468 = vsub.s32 1, %v1467
    %v1469 = vrot.slane %v1366, %v1468
    %1471 = vbcast.lane.b32.xlu0 %v1469, 256
    %v1472 = vpop.permute.xlu0 %1471
    %s1474 = sor.u32 256, 8
    %1475 = vbcast.lane.b32.xlu0 %v1469, %s1474
    %v1476 = vpop.permute.xlu0 %1475
    %v1477 = vlaneseq
    %v1478 = vshrl.u32 %v1477, 7
    %v1479 = vsub.s32 2, %v1478
    %v1480 = vrot.slane %v1366, %v1479
    %1482 = vbcast.lane.b32.xlu0 %v1480, 256
    %v1483 = vpop.permute.xlu0 %1482
    %s1485 = sor.u32 256, 8
    %1486 = vbcast.lane.b32.xlu0 %v1480, %s1485
    %v1487 = vpop.permute.xlu0 %1486
    %v1488 = vlaneseq
    %v1489 = vshrl.u32 %v1488, 7
    %v1490 = vsub.s32 3, %v1489
    %v1491 = vrot.slane %v1366, %v1490
    %1493 = vbcast.lane.b32.xlu0 %v1491, 256
    %v1494 = vpop.permute.xlu0 %1493
    %s1496 = sor.u32 256, 8
    %1497 = vbcast.lane.b32.xlu0 %v1491, %s1496
    %v1498 = vpop.permute.xlu0 %1497
    %v1499 = vlaneseq
    %v1500 = vshrl.u32 %v1499, 7
    %v1501 = vsub.s32 4, %v1500
    %v1502 = vrot.slane %v1366, %v1501
    %1504 = vbcast.lane.b32.xlu0 %v1502, 256
    %v1505 = vpop.permute.xlu0 %1504
    %s1507 = sor.u32 256, 8
    %1508 = vbcast.lane.b32.xlu0 %v1502, %s1507
    %v1509 = vpop.permute.xlu0 %1508
    %v1510 = vlaneseq
    %v1511 = vshrl.u32 %v1510, 7
    %v1512 = vsub.s32 5, %v1511
    %v1513 = vrot.slane %v1366, %v1512
    %1515 = vbcast.lane.b32.xlu0 %v1513, 256
    %v1516 = vpop.permute.xlu0 %1515
    %s1518 = sor.u32 256, 8
    %1519 = vbcast.lane.b32.xlu0 %v1513, %s1518
    %v1520 = vpop.permute.xlu0 %1519
    %v1521 = vlaneseq
    %v1522 = vshrl.u32 %v1521, 7
    %v1523 = vsub.s32 6, %v1522
    %v1524 = vrot.slane %v1366, %v1523
    %1526 = vbcast.lane.b32.xlu0 %v1524, 256
    %v1527 = vpop.permute.xlu0 %1526
    %s1529 = sor.u32 256, 8
    %1530 = vbcast.lane.b32.xlu0 %v1524, %s1529
    %v1531 = vpop.permute.xlu0 %1530
    %v1532 = vlaneseq
    %v1533 = vshrl.u32 %v1532, 7
    %v1534 = vsub.s32 7, %v1533
    %v1535 = vrot.slane %v1366, %v1534
    %1537 = vbcast.lane.b32.xlu0 %v1535, 256
    %v1538 = vpop.permute.xlu0 %1537
    %s1540 = sor.u32 256, 8
    %1541 = vbcast.lane.b32.xlu0 %v1535, %s1540
    %v1542 = vpop.permute.xlu0 %1541
    %v1543 = vld [vmem:[#allocation2] sm:$0xf]
    %v1544 = vld [vmem:[#allocation2 + $0x4] sm:$0xf]
    %v1545 = vld [vmem:[#allocation2 + $0x8] sm:$0xf]
    %v1546 = vld [vmem:[#allocation2 + $0xc] sm:$0xf]
    %v1547 = vld [vmem:[#allocation2 + $0x10] sm:$0xf]
    %v1548 = vld [vmem:[#allocation2 + $0x14] sm:$0xf]
    %v1549 = vld [vmem:[#allocation2 + $0x18] sm:$0xf]
    %v1550 = vld [vmem:[#allocation2 + $0x1c] sm:$0xf]
    %v1551 = vld [vmem:[#allocation2 + $0x20] sm:$0xf]
    %v1552 = vld [vmem:[#allocation2 + $0x24] sm:$0xf]
    %v1553 = vld [vmem:[#allocation2 + $0x28] sm:$0xf]
    %v1554 = vld [vmem:[#allocation2 + $0x2c] sm:$0xf]
    %v1555 = vld [vmem:[#allocation2 + $0x30] sm:$0xf]
    %v1556 = vld [vmem:[#allocation2 + $0x34] sm:$0xf]
    %v1557 = vld [vmem:[#allocation2 + $0x38] sm:$0xf]
    %v1558 = vld [vmem:[#allocation2 + $0x3c] sm:$0xf]
    %v1559 = vld [vmem:[#allocation2 + $0x40] sm:$0xf]
    %v1560 = vld [vmem:[#allocation2 + $0x44] sm:$0xf]
    %v1561 = vld [vmem:[#allocation2 + $0x48] sm:$0xf]
    %v1562 = vld [vmem:[#allocation2 + $0x4c] sm:$0xf]
    %v1563 = vld [vmem:[#allocation2 + $0x50] sm:$0xf]
    %v1564 = vld [vmem:[#allocation2 + $0x54] sm:$0xf]
    %v1565 = vld [vmem:[#allocation2 + $0x58] sm:$0xf]
    %v1566 = vld [vmem:[#allocation2 + $0x5c] sm:$0xf]
    %v1567 = vld [vmem:[#allocation2 + $0x60] sm:$0xf]
    %v1568 = vld [vmem:[#allocation2 + $0x64] sm:$0xf]
    %v1569 = vld [vmem:[#allocation2 + $0x68] sm:$0xf]
    %v1570 = vld [vmem:[#allocation2 + $0x6c] sm:$0xf]
    %v1571 = vld [vmem:[#allocation2 + $0x70] sm:$0xf]
    %v1572 = vld [vmem:[#allocation2 + $0x74] sm:$0xf]
    %v1573 = vld [vmem:[#allocation2 + $0x78] sm:$0xf]
    %v1574 = vld [vmem:[#allocation2 + $0x7c] sm:$0xf]
    %v1575 = vunpack.c.l.bf16 %v1543
    %v1576 = vunpack.c.l.bf16 %v1544
    %v1577 = vunpack.c.l.bf16 %v1545
    %v1578 = vunpack.c.l.bf16 %v1546
    %v1579 = vunpack.c.l.bf16 %v1547
    %v1580 = vunpack.c.l.bf16 %v1548
    %v1581 = vunpack.c.l.bf16 %v1549
    %v1582 = vunpack.c.l.bf16 %v1550
    %v1583 = vunpack.c.l.bf16 %v1551
    %v1584 = vunpack.c.l.bf16 %v1552
    %v1585 = vunpack.c.l.bf16 %v1553
    %v1586 = vunpack.c.l.bf16 %v1554
    %v1587 = vunpack.c.l.bf16 %v1555
    %v1588 = vunpack.c.l.bf16 %v1556
    %v1589 = vunpack.c.l.bf16 %v1557
    %v1590 = vunpack.c.l.bf16 %v1558
    %v1591 = vunpack.c.l.bf16 %v1559
    %v1592 = vunpack.c.l.bf16 %v1560
    %v1593 = vunpack.c.l.bf16 %v1561
    %v1594 = vunpack.c.l.bf16 %v1562
    %v1595 = vunpack.c.l.bf16 %v1563
    %v1596 = vunpack.c.l.bf16 %v1564
    %v1597 = vunpack.c.l.bf16 %v1565
    %v1598 = vunpack.c.l.bf16 %v1566
    %v1599 = vunpack.c.l.bf16 %v1567
    %v1600 = vunpack.c.l.bf16 %v1568
    %v1601 = vunpack.c.l.bf16 %v1569
    %v1602 = vunpack.c.l.bf16 %v1570
    %v1603 = vunpack.c.l.bf16 %v1571
    %v1604 = vunpack.c.l.bf16 %v1572
    %v1605 = vunpack.c.l.bf16 %v1573
    %v1606 = vunpack.c.l.bf16 %v1574
    %v1607 = vmul.f32 %v1373, %v1575
    %v1608 = vmul.f32 %v1377, %v1576
    %v1609 = vmul.f32 %v1384, %v1577
    %v1610 = vmul.f32 %v1388, %v1578
    %v1611 = vmul.f32 %v1395, %v1579
    %v1612 = vmul.f32 %v1399, %v1580
    %v1613 = vmul.f32 %v1406, %v1581
    %v1614 = vmul.f32 %v1410, %v1582
    %v1615 = vmul.f32 %v1417, %v1583
    %v1616 = vmul.f32 %v1421, %v1584
    %v1617 = vmul.f32 %v1428, %v1585
    %v1618 = vmul.f32 %v1432, %v1586
    %v1619 = vmul.f32 %v1439, %v1587
    %v1620 = vmul.f32 %v1443, %v1588
    %v1621 = vmul.f32 %v1450, %v1589
    %v1622 = vmul.f32 %v1454, %v1590
    %v1623 = vmul.f32 %v1461, %v1591
    %v1624 = vmul.f32 %v1465, %v1592
    %v1625 = vmul.f32 %v1472, %v1593
    %v1626 = vmul.f32 %v1476, %v1594
    %v1627 = vmul.f32 %v1483, %v1595
    %v1628 = vmul.f32 %v1487, %v1596
    %v1629 = vmul.f32 %v1494, %v1597
    %v1630 = vmul.f32 %v1498, %v1598
    %v1631 = vmul.f32 %v1505, %v1599
    %v1632 = vmul.f32 %v1509, %v1600
    %v1633 = vmul.f32 %v1516, %v1601
    %v1634 = vmul.f32 %v1520, %v1602
    %v1635 = vmul.f32 %v1527, %v1603
    %v1636 = vmul.f32 %v1531, %v1604
    %v1637 = vmul.f32 %v1538, %v1605
    %v1638 = vmul.f32 %v1542, %v1606
    %v1639 = vadd.f32 %v1607, %v1608
    %v1640 = vrot.slane %v1639, 4
    %v1641 = vadd.f32 %v1639, %v1640
    %v1642 = vrot.slane %v1641, 2
    %v1643 = vadd.f32 %v1641, %v1642
    %v1644 = vrot.slane %v1643, 1
    %v1645 = vadd.f32 %v1643, %v1644
    %v1646 = vadd.f32 %v1609, %v1610
    %v1647 = vrot.slane %v1646, 4
    %v1648 = vadd.f32 %v1646, %v1647
    %v1649 = vrot.slane %v1648, 2
    %v1650 = vadd.f32 %v1648, %v1649
    %v1651 = vrot.slane %v1650, 1
    %v1652 = vadd.f32 %v1650, %v1651
    %v1653 = vadd.f32 %v1611, %v1612
    %v1654 = vrot.slane %v1653, 4
    %v1655 = vadd.f32 %v1653, %v1654
    %v1656 = vrot.slane %v1655, 2
    %v1657 = vadd.f32 %v1655, %v1656
    %v1658 = vrot.slane %v1657, 1
    %v1659 = vadd.f32 %v1657, %v1658
    %v1660 = vadd.f32 %v1613, %v1614
    %v1661 = vrot.slane %v1660, 4
    %v1662 = vadd.f32 %v1660, %v1661
    %v1663 = vrot.slane %v1662, 2
    %v1664 = vadd.f32 %v1662, %v1663
    %v1665 = vrot.slane %v1664, 1
    %v1666 = vadd.f32 %v1664, %v1665
    %v1667 = vadd.f32 %v1615, %v1616
    %v1668 = vrot.slane %v1667, 4
    %v1669 = vadd.f32 %v1667, %v1668
    %v1670 = vrot.slane %v1669, 2
    %v1671 = vadd.f32 %v1669, %v1670
    %v1672 = vrot.slane %v1671, 1
    %v1673 = vadd.f32 %v1671, %v1672
    %v1674 = vadd.f32 %v1617, %v1618
    %v1675 = vrot.slane %v1674, 4
    %v1676 = vadd.f32 %v1674, %v1675
    %v1677 = vrot.slane %v1676, 2
    %v1678 = vadd.f32 %v1676, %v1677
    %v1679 = vrot.slane %v1678, 1
    %v1680 = vadd.f32 %v1678, %v1679
    %v1681 = vadd.f32 %v1619, %v1620
    %v1682 = vrot.slane %v1681, 4
    %v1683 = vadd.f32 %v1681, %v1682
    %v1684 = vrot.slane %v1683, 2
    %v1685 = vadd.f32 %v1683, %v1684
    %v1686 = vrot.slane %v1685, 1
    %v1687 = vadd.f32 %v1685, %v1686
    %v1688 = vadd.f32 %v1621, %v1622
    %v1689 = vrot.slane %v1688, 4
    %v1690 = vadd.f32 %v1688, %v1689
    %v1691 = vrot.slane %v1690, 2
    %v1692 = vadd.f32 %v1690, %v1691
    %v1693 = vrot.slane %v1692, 1
    %v1694 = vadd.f32 %v1692, %v1693
    %v1695 = vadd.f32 %v1623, %v1624
    %v1696 = vrot.slane %v1695, 4
    %v1697 = vadd.f32 %v1695, %v1696
    %v1698 = vrot.slane %v1697, 2
    %v1699 = vadd.f32 %v1697, %v1698
    %v1700 = vrot.slane %v1699, 1
    %v1701 = vadd.f32 %v1699, %v1700
    %v1702 = vadd.f32 %v1625, %v1626
    %v1703 = vrot.slane %v1702, 4
    %v1704 = vadd.f32 %v1702, %v1703
    %v1705 = vrot.slane %v1704, 2
    %v1706 = vadd.f32 %v1704, %v1705
    %v1707 = vrot.slane %v1706, 1
    %v1708 = vadd.f32 %v1706, %v1707
    %v1709 = vadd.f32 %v1627, %v1628
    %v1710 = vrot.slane %v1709, 4
    %v1711 = vadd.f32 %v1709, %v1710
    %v1712 = vrot.slane %v1711, 2
    %v1713 = vadd.f32 %v1711, %v1712
    %v1714 = vrot.slane %v1713, 1
    %v1715 = vadd.f32 %v1713, %v1714
    %v1716 = vadd.f32 %v1629, %v1630
    %v1717 = vrot.slane %v1716, 4
    %v1718 = vadd.f32 %v1716, %v1717
    %v1719 = vrot.slane %v1718, 2
    %v1720 = vadd.f32 %v1718, %v1719
    %v1721 = vrot.slane %v1720, 1
    %v1722 = vadd.f32 %v1720, %v1721
    %v1723 = vadd.f32 %v1631, %v1632
    %v1724 = vrot.slane %v1723, 4
    %v1725 = vadd.f32 %v1723, %v1724
    %v1726 = vrot.slane %v1725, 2
    %v1727 = vadd.f32 %v1725, %v1726
    %v1728 = vrot.slane %v1727, 1
    %v1729 = vadd.f32 %v1727, %v1728
    %v1730 = vadd.f32 %v1633, %v1634
    %v1731 = vrot.slane %v1730, 4
    %v1732 = vadd.f32 %v1730, %v1731
    %v1733 = vrot.slane %v1732, 2
    %v1734 = vadd.f32 %v1732, %v1733
    %v1735 = vrot.slane %v1734, 1
    %v1736 = vadd.f32 %v1734, %v1735
    %v1737 = vadd.f32 %v1635, %v1636
    %v1738 = vrot.slane %v1737, 4
    %v1739 = vadd.f32 %v1737, %v1738
    %v1740 = vrot.slane %v1739, 2
    %v1741 = vadd.f32 %v1739, %v1740
    %v1742 = vrot.slane %v1741, 1
    %v1743 = vadd.f32 %v1741, %v1742
    %v1744 = vadd.f32 %v1637, %v1638
    %v1745 = vrot.slane %v1744, 4
    %v1746 = vadd.f32 %v1744, %v1745
    %v1747 = vrot.slane %v1746, 2
    %v1748 = vadd.f32 %v1746, %v1747
    %v1749 = vrot.slane %v1748, 1
    %v1750 = vadd.f32 %v1748, %v1749
    %v1767 = vsel %vm1311, %v1652, %v1645
    %v1768 = vsel %vm1313, %v1659, %v1767
    %v1769 = vsel %vm1315, %v1666, %v1768
    %v1770 = vsel %vm1317, %v1673, %v1769
    %v1771 = vsel %vm1319, %v1680, %v1770
    %v1772 = vsel %vm1321, %v1687, %v1771
    %v1773 = vsel %vm1323, %v1694, %v1772
    %v1774 = vsel %vm1311, %v1708, %v1701
    %v1775 = vsel %vm1313, %v1715, %v1774
    %v1776 = vsel %vm1315, %v1722, %v1775
    %v1777 = vsel %vm1317, %v1729, %v1776
    %v1778 = vsel %vm1319, %v1736, %v1777
    %v1779 = vsel %vm1321, %v1743, %v1778
    %v1780 = vsel %vm1323, %v1750, %v1779
    %1783 = vst [vmem:[#allocation11] sm:$0xff] %v1773
    %1784 = vst [vmem:[#allocation11 + $0x8] sm:$0xff] %v1780
    %v1785 = vpack.c.bf16 %v1645, %v1645
    %v1786 = vpack.c.bf16 %v1652, %v1652
    %v1787 = vpack.c.bf16 %v1659, %v1659
    %v1788 = vpack.c.bf16 %v1666, %v1666
    %v1789 = vpack.c.bf16 %v1673, %v1673
    %v1790 = vpack.c.bf16 %v1680, %v1680
    %v1791 = vpack.c.bf16 %v1687, %v1687
    %v1792 = vpack.c.bf16 %v1694, %v1694
    %v1793 = vpack.c.bf16 %v1701, %v1701
    %v1794 = vpack.c.bf16 %v1708, %v1708
    %v1795 = vpack.c.bf16 %v1715, %v1715
    %v1796 = vpack.c.bf16 %v1722, %v1722
    %v1797 = vpack.c.bf16 %v1729, %v1729
    %v1798 = vpack.c.bf16 %v1736, %v1736
    %v1799 = vpack.c.bf16 %v1743, %v1743
    %v1800 = vpack.c.bf16 %v1750, %v1750
    %s1801 = scalar_lea.vmem [#allocation8], 256
    %v1802 = vld [vmem:[%s1801] sm:$0xf]
    %v1803 = vld [vmem:[%s1801 + $0x4] sm:$0xf]
    %v1804 = vld [vmem:[%s1801 + $0x8] sm:$0xf]
    %v1805 = vld [vmem:[%s1801 + $0xc] sm:$0xf]
    %v1806 = vld [vmem:[%s1801 + $0x10] sm:$0xf]
    %v1807 = vld [vmem:[%s1801 + $0x14] sm:$0xf]
    %v1808 = vld [vmem:[%s1801 + $0x18] sm:$0xf]
    %v1809 = vld [vmem:[%s1801 + $0x1c] sm:$0xf]
    %v1810 = vld [vmem:[%s1801 + $0x20] sm:$0xf]
    %v1811 = vld [vmem:[%s1801 + $0x24] sm:$0xf]
    %v1812 = vld [vmem:[%s1801 + $0x28] sm:$0xf]
    %v1813 = vld [vmem:[%s1801 + $0x2c] sm:$0xf]
    %v1814 = vld [vmem:[%s1801 + $0x30] sm:$0xf]
    %v1815 = vld [vmem:[%s1801 + $0x34] sm:$0xf]
    %v1816 = vld [vmem:[%s1801 + $0x38] sm:$0xf]
    %v1817 = vld [vmem:[%s1801 + $0x3c] sm:$0xf]
    %s1818 = scalar_lea.vmem [#allocation8], 320
    %v1819 = vld [vmem:[%s1818] sm:$0xf]
    %v1820 = vld [vmem:[%s1818 + $0x4] sm:$0xf]
    %v1821 = vld [vmem:[%s1818 + $0x8] sm:$0xf]
    %v1822 = vld [vmem:[%s1818 + $0xc] sm:$0xf]
    %v1823 = vld [vmem:[%s1818 + $0x10] sm:$0xf]
    %v1824 = vld [vmem:[%s1818 + $0x14] sm:$0xf]
    %v1825 = vld [vmem:[%s1818 + $0x18] sm:$0xf]
    %v1826 = vld [vmem:[%s1818 + $0x1c] sm:$0xf]
    %v1827 = vld [vmem:[%s1818 + $0x20] sm:$0xf]
    %v1828 = vld [vmem:[%s1818 + $0x24] sm:$0xf]
    %v1829 = vld [vmem:[%s1818 + $0x28] sm:$0xf]
    %v1830 = vld [vmem:[%s1818 + $0x2c] sm:$0xf]
    %v1831 = vld [vmem:[%s1818 + $0x30] sm:$0xf]
    %v1832 = vld [vmem:[%s1818 + $0x34] sm:$0xf]
    %v1833 = vld [vmem:[%s1818 + $0x38] sm:$0xf]
    %v1834 = vld [vmem:[%s1818 + $0x3c] sm:$0xf]
    %v1851 = vunpack.c.l.b16 %v1819
    %v1852 = vunpack.c.l.b16 %v1820
    %v1853 = vunpack.c.l.b16 %v1821
    %v1854 = vunpack.c.l.b16 %v1822
    %v1855 = vunpack.c.l.b16 %v1823
    %v1856 = vunpack.c.l.b16 %v1824
    %v1857 = vunpack.c.l.b16 %v1825
    %v1858 = vunpack.c.l.b16 %v1826
    %v1859 = vunpack.c.l.b16 %v1827
    %v1860 = vunpack.c.l.b16 %v1828
    %v1861 = vunpack.c.l.b16 %v1829
    %v1862 = vunpack.c.l.b16 %v1830
    %v1863 = vunpack.c.l.b16 %v1831
    %v1864 = vunpack.c.l.b16 %v1832
    %v1865 = vunpack.c.l.b16 %v1833
    %v1866 = vunpack.c.l.b16 %v1834
    %v1867 = vpack.c.b16 %v1852, %v1851
    %v1868 = vpack.c.b16 %v1854, %v1853
    %v1869 = vpack.c.b16 %v1856, %v1855
    %v1870 = vpack.c.b16 %v1858, %v1857
    %v1871 = vpack.c.b16 %v1860, %v1859
    %v1872 = vpack.c.b16 %v1862, %v1861
    %v1873 = vpack.c.b16 %v1864, %v1863
    %v1874 = vpack.c.b16 %v1866, %v1865
    %1883 = vmatprep.subr.bf16.mxu0 0
    %1884 = vmatpush1.bf16.msra.mxu0 %v1874
    %1885 = vmatprep.subr.bf16.mxu0 0
    %1886 = vmatpush1.bf16.msra.mxu0 %v1873
    %1887 = vmatprep.subr.bf16.mxu0 0
    %1888 = vmatpush1.bf16.msra.mxu0 %v1872
    %1889 = vmatprep.subr.bf16.mxu0 0
    %1890 = vmatpush1.bf16.msra.mxu0 %v1871
    %1891 = vmatprep.subr.bf16.mxu0 0
    %1892 = vmatpush1.bf16.msra.mxu0 %v1870
    %1893 = vmatprep.subr.bf16.mxu0 0
    %1894 = vmatpush1.bf16.msra.mxu0 %v1869
    %1895 = vmatprep.subr.bf16.mxu0 0
    %1896 = vmatpush1.bf16.msra.mxu0 %v1868
    %1897 = vmatprep.subr.bf16.mxu0 0
    %1898 = vmatpush1.bf16.msra.mxu0 %v1867
    %1899 = vmatprep.subr.bf16.mxu0 0
    %1900 = vmatpush2.bf16.msra.mxu0 0
    %1901 = vmatprep.subr.bf16.mxu0 0
    %1902 = vmatpush2.bf16.msra.mxu0 0
    %1903 = vmatprep.subr.bf16.mxu0 0
    %1904 = vmatpush2.bf16.msra.mxu0 0
    %1905 = vmatprep.subr.bf16.mxu0 0
    %1906 = vmatpush2.bf16.msra.mxu0 0
    %1907 = vmatprep.subr.bf16.mxu0 0
    %1908 = vmatpush2.bf16.msra.mxu0 0
    %1909 = vmatprep.subr.bf16.mxu0 0
    %1910 = vmatpush2.bf16.msra.mxu0 0
    %1911 = vmatprep.subr.bf16.mxu0 0
    %1912 = vmatpush2.bf16.msra.mxu0 0
    %1913 = vmatprep.subr.bf16.mxu0 0
    %1914 = vmatpush2.bf16.msra.mxu0 0
    %1915 = vmatprep.mubr.bf16.mxu0 0
    %1916 = vmatmul.mubr.bf16.gmra.mxu0 %v602
    %v1917 = vpop.f32.mrf.mxu0
    %v1918 = vadd.f32 0.0, %v1917
    %v1919 = vpop.f32.mrf.mxu0
    %v1920 = vpop.f32.mrf.mxu0
    %v1921 = vadd.f32 0.0, %v1920
    %v1922 = vpop.f32.mrf.mxu0
    %1923 = vdwg.mxu0
    %v1940 = vunpack.c.l.b16 %v1785
    %v1941 = vunpack.c.l.b16 %v1786
    %v1942 = vunpack.c.l.b16 %v1787
    %v1943 = vunpack.c.l.b16 %v1788
    %v1944 = vunpack.c.l.b16 %v1789
    %v1945 = vunpack.c.l.b16 %v1790
    %v1946 = vunpack.c.l.b16 %v1791
    %v1947 = vunpack.c.l.b16 %v1792
    %v1948 = vunpack.c.l.b16 %v1793
    %v1949 = vunpack.c.l.b16 %v1794
    %v1950 = vunpack.c.l.b16 %v1795
    %v1951 = vunpack.c.l.b16 %v1796
    %v1952 = vunpack.c.l.b16 %v1797
    %v1953 = vunpack.c.l.b16 %v1798
    %v1954 = vunpack.c.l.b16 %v1799
    %v1955 = vunpack.c.l.b16 %v1800
    %v1956 = vsel %vm1311, %v1941, %v1940
    %v1957 = vsel %vm1313, %v1942, %v1956
    %v1958 = vsel %vm1315, %v1943, %v1957
    %v1959 = vsel %vm1317, %v1944, %v1958
    %v1960 = vsel %vm1319, %v1945, %v1959
    %v1961 = vsel %vm1321, %v1946, %v1960
    %v1962 = vsel %vm1323, %v1947, %v1961
    %v1963 = vsel %vm1311, %v1949, %v1948
    %v1964 = vsel %vm1313, %v1950, %v1963
    %v1965 = vsel %vm1315, %v1951, %v1964
    %v1966 = vsel %vm1317, %v1952, %v1965
    %v1967 = vsel %vm1319, %v1953, %v1966
    %v1968 = vsel %vm1321, %v1954, %v1967
    %v1969 = vsel %vm1323, %v1955, %v1968
    %v1970 = vpack.c.b16 %v1969, %v1962
    %v1988 = vunpack.c.l.b16 %v1802
    %v1989 = vunpack.c.l.b16 %v1803
    %v1990 = vunpack.c.l.b16 %v1804
    %v1991 = vunpack.c.l.b16 %v1805
    %v1992 = vunpack.c.l.b16 %v1806
    %v1993 = vunpack.c.l.b16 %v1807
    %v1994 = vunpack.c.l.b16 %v1808
    %v1995 = vunpack.c.l.b16 %v1809
    %v1996 = vunpack.c.l.b16 %v1810
    %v1997 = vunpack.c.l.b16 %v1811
    %v1998 = vunpack.c.l.b16 %v1812
    %v1999 = vunpack.c.l.b16 %v1813
    %v2000 = vunpack.c.l.b16 %v1814
    %v2001 = vunpack.c.l.b16 %v1815
    %v2002 = vunpack.c.l.b16 %v1816
    %v2003 = vunpack.c.l.b16 %v1817
    %v2004 = vpack.c.b16 %v1989, %v1988
    %v2005 = vpack.c.b16 %v1991, %v1990
    %v2006 = vpack.c.b16 %v1993, %v1992
    %v2007 = vpack.c.b16 %v1995, %v1994
    %v2008 = vpack.c.b16 %v1997, %v1996
    %v2009 = vpack.c.b16 %v1999, %v1998
    %v2010 = vpack.c.b16 %v2001, %v2000
    %v2011 = vpack.c.b16 %v2003, %v2002
    %2020 = vmatprep.subr.bf16.mxu0 0
    %2021 = vmatpush1.bf16.msra.mxu0 %v2011
    %2022 = vmatprep.subr.bf16.mxu0 0
    %2023 = vmatpush1.bf16.msra.mxu0 %v2010
    %2024 = vmatprep.subr.bf16.mxu0 0
    %2025 = vmatpush1.bf16.msra.mxu0 %v2009
    %2026 = vmatprep.subr.bf16.mxu0 0
    %2027 = vmatpush1.bf16.msra.mxu0 %v2008
    %2028 = vmatprep.subr.bf16.mxu0 0
    %2029 = vmatpush1.bf16.msra.mxu0 %v2007
    %2030 = vmatprep.subr.bf16.mxu0 0
    %2031 = vmatpush1.bf16.msra.mxu0 %v2006
    %2032 = vmatprep.subr.bf16.mxu0 0
    %2033 = vmatpush1.bf16.msra.mxu0 %v2005
    %2034 = vmatprep.subr.bf16.mxu0 0
    %2035 = vmatpush1.bf16.msra.mxu0 %v2004
    %2036 = vmatprep.subr.bf16.mxu0 0
    %2037 = vmatpush2.bf16.msra.mxu0 0
    %2038 = vmatprep.subr.bf16.mxu0 0
    %2039 = vmatpush2.bf16.msra.mxu0 0
    %2040 = vmatprep.subr.bf16.mxu0 0
    %2041 = vmatpush2.bf16.msra.mxu0 0
    %2042 = vmatprep.subr.bf16.mxu0 0
    %2043 = vmatpush2.bf16.msra.mxu0 0
    %2044 = vmatprep.subr.bf16.mxu0 0
    %2045 = vmatpush2.bf16.msra.mxu0 0
    %2046 = vmatprep.subr.bf16.mxu0 0
    %2047 = vmatpush2.bf16.msra.mxu0 0
    %2048 = vmatprep.subr.bf16.mxu0 0
    %2049 = vmatpush2.bf16.msra.mxu0 0
    %2050 = vmatprep.subr.bf16.mxu0 0
    %2051 = vmatpush2.bf16.msra.mxu0 0
    %2052 = vmatprep.mubr.bf16.mxu0 0
    %2053 = vmatmul.mubr.bf16.gmra.mxu0 %v1970
    %v2054 = vpop.f32.mrf.mxu0
    %v2055 = vadd.f32 %v1918, %v2054
    %v2056 = vpop.f32.mrf.mxu0
    %v2057 = vpop.f32.mrf.mxu0
    %v2058 = vadd.f32 %v1921, %v2057
    %v2059 = vpop.f32.mrf.mxu0
    %2060 = vdwg.mxu0
    %s2061 = scalar_lea.vmem [#allocation8], 384
    %v2062 = vld [vmem:[%s2061] sm:$0xf]
    %v2063 = vld [vmem:[%s2061 + $0x4] sm:$0xf]
    %v2064 = vld [vmem:[%s2061 + $0x8] sm:$0xf]
    %v2065 = vld [vmem:[%s2061 + $0xc] sm:$0xf]
    %v2066 = vld [vmem:[%s2061 + $0x10] sm:$0xf]
    %v2067 = vld [vmem:[%s2061 + $0x14] sm:$0xf]
    %v2068 = vld [vmem:[%s2061 + $0x18] sm:$0xf]
    %v2069 = vld [vmem:[%s2061 + $0x1c] sm:$0xf]
    %v2070 = vld [vmem:[%s2061 + $0x20] sm:$0xf]
    %v2071 = vld [vmem:[%s2061 + $0x24] sm:$0xf]
    %v2072 = vld [vmem:[%s2061 + $0x28] sm:$0xf]
    %v2073 = vld [vmem:[%s2061 + $0x2c] sm:$0xf]
    %v2074 = vld [vmem:[%s2061 + $0x30] sm:$0xf]
    %v2075 = vld [vmem:[%s2061 + $0x34] sm:$0xf]
    %v2076 = vld [vmem:[%s2061 + $0x38] sm:$0xf]
    %v2077 = vld [vmem:[%s2061 + $0x3c] sm:$0xf]
    %v2094 = vunpack.c.l.b16 %v2062
    %v2095 = vunpack.c.l.b16 %v2063
    %v2096 = vunpack.c.l.b16 %v2064
    %v2097 = vunpack.c.l.b16 %v2065
    %v2098 = vunpack.c.l.b16 %v2066
    %v2099 = vunpack.c.l.b16 %v2067
    %v2100 = vunpack.c.l.b16 %v2068
    %v2101 = vunpack.c.l.b16 %v2069
    %v2102 = vunpack.c.l.b16 %v2070
    %v2103 = vunpack.c.l.b16 %v2071
    %v2104 = vunpack.c.l.b16 %v2072
    %v2105 = vunpack.c.l.b16 %v2073
    %v2106 = vunpack.c.l.b16 %v2074
    %v2107 = vunpack.c.l.b16 %v2075
    %v2108 = vunpack.c.l.b16 %v2076
    %v2109 = vunpack.c.l.b16 %v2077
    %v2110 = vpack.c.b16 %v2095, %v2094
    %v2111 = vpack.c.b16 %v2097, %v2096
    %v2112 = vpack.c.b16 %v2099, %v2098
    %v2113 = vpack.c.b16 %v2101, %v2100
    %v2114 = vpack.c.b16 %v2103, %v2102
    %v2115 = vpack.c.b16 %v2105, %v2104
    %v2116 = vpack.c.b16 %v2107, %v2106
    %v2117 = vpack.c.b16 %v2109, %v2108
    %2126 = vmatprep.subr.bf16.mxu0 0
    %2127 = vmatpush1.bf16.msra.mxu0 %v2117
    %2128 = vmatprep.subr.bf16.mxu0 0
    %2129 = vmatpush1.bf16.msra.mxu0 %v2116
    %2130 = vmatprep.subr.bf16.mxu0 0
    %2131 = vmatpush1.bf16.msra.mxu0 %v2115
    %2132 = vmatprep.subr.bf16.mxu0 0
    %2133 = vmatpush1.bf16.msra.mxu0 %v2114
    %2134 = vmatprep.subr.bf16.mxu0 0
    %2135 = vmatpush1.bf16.msra.mxu0 %v2113
    %2136 = vmatprep.subr.bf16.mxu0 0
    %2137 = vmatpush1.bf16.msra.mxu0 %v2112
    %2138 = vmatprep.subr.bf16.mxu0 0
    %2139 = vmatpush1.bf16.msra.mxu0 %v2111
    %2140 = vmatprep.subr.bf16.mxu0 0
    %2141 = vmatpush1.bf16.msra.mxu0 %v2110
    %2142 = vmatprep.subr.bf16.mxu0 0
    %2143 = vmatpush2.bf16.msra.mxu0 0
    %2144 = vmatprep.subr.bf16.mxu0 0
    %2145 = vmatpush2.bf16.msra.mxu0 0
    %2146 = vmatprep.subr.bf16.mxu0 0
    %2147 = vmatpush2.bf16.msra.mxu0 0
    %2148 = vmatprep.subr.bf16.mxu0 0
    %2149 = vmatpush2.bf16.msra.mxu0 0
    %2150 = vmatprep.subr.bf16.mxu0 0
    %2151 = vmatpush2.bf16.msra.mxu0 0
    %2152 = vmatprep.subr.bf16.mxu0 0
    %2153 = vmatpush2.bf16.msra.mxu0 0
    %2154 = vmatprep.subr.bf16.mxu0 0
    %2155 = vmatpush2.bf16.msra.mxu0 0
    %2156 = vmatprep.subr.bf16.mxu0 0
    %2157 = vmatpush2.bf16.msra.mxu0 0
    %2158 = vmatprep.mubr.bf16.mxu0 0
    %2159 = vmatmul.mubr.bf16.gmra.mxu0 %v366
    %v2160 = vpop.f32.mrf.mxu0
    %v2161 = vadd.f32 0.0, %v2160
    %v2162 = vpop.f32.mrf.mxu0
    %v2163 = vpop.f32.mrf.mxu0
    %v2164 = vadd.f32 0.0, %v2163
    %v2165 = vpop.f32.mrf.mxu0
    %2166 = vdwg.mxu0
    %v2167 = vadd.f32 %v2055, %v2161
    %v2168 = vadd.f32 %v2058, %v2164
    %v2169 = vld [vmem:[%s6 + $0x4] sm:$0x1]
    %v2170 = vlaneseq
    %v2171 = vshrl.u32 %v2170, 7
    %v2172 = vsub.s32 0, %v2171
    %v2173 = vrot.slane %v2169, %v2172
    %v2174 = vadd.f32 %v2167, %v2173
    %v2175 = vadd.f32 %v2168, %v2173
    %s2176 = scalar_lea.vmem [#allocation8], 576
    %v2177 = vld [vmem:[%s2176] sm:$0xf]
    %v2178 = vld [vmem:[%s2176 + $0x4] sm:$0xf]
    %v2179 = vld [vmem:[%s2176 + $0x8] sm:$0xf]
    %v2180 = vld [vmem:[%s2176 + $0xc] sm:$0xf]
    %v2181 = vld [vmem:[%s2176 + $0x10] sm:$0xf]
    %v2182 = vld [vmem:[%s2176 + $0x14] sm:$0xf]
    %v2183 = vld [vmem:[%s2176 + $0x18] sm:$0xf]
    %v2184 = vld [vmem:[%s2176 + $0x1c] sm:$0xf]
    %v2185 = vld [vmem:[%s2176 + $0x20] sm:$0xf]
    %v2186 = vld [vmem:[%s2176 + $0x24] sm:$0xf]
    %v2187 = vld [vmem:[%s2176 + $0x28] sm:$0xf]
    %v2188 = vld [vmem:[%s2176 + $0x2c] sm:$0xf]
    %v2189 = vld [vmem:[%s2176 + $0x30] sm:$0xf]
    %v2190 = vld [vmem:[%s2176 + $0x34] sm:$0xf]
    %v2191 = vld [vmem:[%s2176 + $0x38] sm:$0xf]
    %v2192 = vld [vmem:[%s2176 + $0x3c] sm:$0xf]
    %s2193 = scalar_lea.vmem [#allocation8], 640
    %v2194 = vld [vmem:[%s2193] sm:$0xf]
    %v2195 = vld [vmem:[%s2193 + $0x4] sm:$0xf]
    %v2196 = vld [vmem:[%s2193 + $0x8] sm:$0xf]
    %v2197 = vld [vmem:[%s2193 + $0xc] sm:$0xf]
    %v2198 = vld [vmem:[%s2193 + $0x10] sm:$0xf]
    %v2199 = vld [vmem:[%s2193 + $0x14] sm:$0xf]
    %v2200 = vld [vmem:[%s2193 + $0x18] sm:$0xf]
    %v2201 = vld [vmem:[%s2193 + $0x1c] sm:$0xf]
    %v2202 = vld [vmem:[%s2193 + $0x20] sm:$0xf]
    %v2203 = vld [vmem:[%s2193 + $0x24] sm:$0xf]
    %v2204 = vld [vmem:[%s2193 + $0x28] sm:$0xf]
    %v2205 = vld [vmem:[%s2193 + $0x2c] sm:$0xf]
    %v2206 = vld [vmem:[%s2193 + $0x30] sm:$0xf]
    %v2207 = vld [vmem:[%s2193 + $0x34] sm:$0xf]
    %v2208 = vld [vmem:[%s2193 + $0x38] sm:$0xf]
    %v2209 = vld [vmem:[%s2193 + $0x3c] sm:$0xf]
    %v2226 = vunpack.c.l.b16 %v2194
    %v2227 = vunpack.c.l.b16 %v2195
    %v2228 = vunpack.c.l.b16 %v2196
    %v2229 = vunpack.c.l.b16 %v2197
    %v2230 = vunpack.c.l.b16 %v2198
    %v2231 = vunpack.c.l.b16 %v2199
    %v2232 = vunpack.c.l.b16 %v2200
    %v2233 = vunpack.c.l.b16 %v2201
    %v2234 = vunpack.c.l.b16 %v2202
    %v2235 = vunpack.c.l.b16 %v2203
    %v2236 = vunpack.c.l.b16 %v2204
    %v2237 = vunpack.c.l.b16 %v2205
    %v2238 = vunpack.c.l.b16 %v2206
    %v2239 = vunpack.c.l.b16 %v2207
    %v2240 = vunpack.c.l.b16 %v2208
    %v2241 = vunpack.c.l.b16 %v2209
    %v2242 = vpack.c.b16 %v2227, %v2226
    %v2243 = vpack.c.b16 %v2229, %v2228
    %v2244 = vpack.c.b16 %v2231, %v2230
    %v2245 = vpack.c.b16 %v2233, %v2232
    %v2246 = vpack.c.b16 %v2235, %v2234
    %v2247 = vpack.c.b16 %v2237, %v2236
    %v2248 = vpack.c.b16 %v2239, %v2238
    %v2249 = vpack.c.b16 %v2241, %v2240
    %2258 = vmatprep.subr.bf16.mxu0 0
    %2259 = vmatpush1.bf16.msra.mxu0 %v2249
    %2260 = vmatprep.subr.bf16.mxu0 0
    %2261 = vmatpush1.bf16.msra.mxu0 %v2248
    %2262 = vmatprep.subr.bf16.mxu0 0
    %2263 = vmatpush1.bf16.msra.mxu0 %v2247
    %2264 = vmatprep.subr.bf16.mxu0 0
    %2265 = vmatpush1.bf16.msra.mxu0 %v2246
    %2266 = vmatprep.subr.bf16.mxu0 0
    %2267 = vmatpush1.bf16.msra.mxu0 %v2245
    %2268 = vmatprep.subr.bf16.mxu0 0
    %2269 = vmatpush1.bf16.msra.mxu0 %v2244
    %2270 = vmatprep.subr.bf16.mxu0 0
    %2271 = vmatpush1.bf16.msra.mxu0 %v2243
    %2272 = vmatprep.subr.bf16.mxu0 0
    %2273 = vmatpush1.bf16.msra.mxu0 %v2242
    %2274 = vmatprep.subr.bf16.mxu0 0
    %2275 = vmatpush2.bf16.msra.mxu0 0
    %2276 = vmatprep.subr.bf16.mxu0 0
    %2277 = vmatpush2.bf16.msra.mxu0 0
    %2278 = vmatprep.subr.bf16.mxu0 0
    %2279 = vmatpush2.bf16.msra.mxu0 0
    %2280 = vmatprep.subr.bf16.mxu0 0
    %2281 = vmatpush2.bf16.msra.mxu0 0
    %2282 = vmatprep.subr.bf16.mxu0 0
    %2283 = vmatpush2.bf16.msra.mxu0 0
    %2284 = vmatprep.subr.bf16.mxu0 0
    %2285 = vmatpush2.bf16.msra.mxu0 0
    %2286 = vmatprep.subr.bf16.mxu0 0
    %2287 = vmatpush2.bf16.msra.mxu0 0
    %2288 = vmatprep.subr.bf16.mxu0 0
    %2289 = vmatpush2.bf16.msra.mxu0 0
    %2290 = vmatprep.mubr.bf16.mxu0 0
    %2291 = vmatmul.mubr.bf16.gmra.mxu0 %v602
    %v2292 = vpop.f32.mrf.mxu0
    %v2293 = vadd.f32 0.0, %v2292
    %v2294 = vpop.f32.mrf.mxu0
    %v2295 = vpop.f32.mrf.mxu0
    %v2296 = vadd.f32 0.0, %v2295
    %v2297 = vpop.f32.mrf.mxu0
    %2298 = vdwg.mxu0
    %v2315 = vunpack.c.l.b16 %v2177
    %v2316 = vunpack.c.l.b16 %v2178
    %v2317 = vunpack.c.l.b16 %v2179
    %v2318 = vunpack.c.l.b16 %v2180
    %v2319 = vunpack.c.l.b16 %v2181
    %v2320 = vunpack.c.l.b16 %v2182
    %v2321 = vunpack.c.l.b16 %v2183
    %v2322 = vunpack.c.l.b16 %v2184
    %v2323 = vunpack.c.l.b16 %v2185
    %v2324 = vunpack.c.l.b16 %v2186
    %v2325 = vunpack.c.l.b16 %v2187
    %v2326 = vunpack.c.l.b16 %v2188
    %v2327 = vunpack.c.l.b16 %v2189
    %v2328 = vunpack.c.l.b16 %v2190
    %v2329 = vunpack.c.l.b16 %v2191
    %v2330 = vunpack.c.l.b16 %v2192
    %v2331 = vpack.c.b16 %v2316, %v2315
    %v2332 = vpack.c.b16 %v2318, %v2317
    %v2333 = vpack.c.b16 %v2320, %v2319
    %v2334 = vpack.c.b16 %v2322, %v2321
    %v2335 = vpack.c.b16 %v2324, %v2323
    %v2336 = vpack.c.b16 %v2326, %v2325
    %v2337 = vpack.c.b16 %v2328, %v2327
    %v2338 = vpack.c.b16 %v2330, %v2329
    %2347 = vmatprep.subr.bf16.mxu0 0
    %2348 = vmatpush1.bf16.msra.mxu0 %v2338
    %2349 = vmatprep.subr.bf16.mxu0 0
    %2350 = vmatpush1.bf16.msra.mxu0 %v2337
    %2351 = vmatprep.subr.bf16.mxu0 0
    %2352 = vmatpush1.bf16.msra.mxu0 %v2336
    %2353 = vmatprep.subr.bf16.mxu0 0
    %2354 = vmatpush1.bf16.msra.mxu0 %v2335
    %2355 = vmatprep.subr.bf16.mxu0 0
    %2356 = vmatpush1.bf16.msra.mxu0 %v2334
    %2357 = vmatprep.subr.bf16.mxu0 0
    %2358 = vmatpush1.bf16.msra.mxu0 %v2333
    %2359 = vmatprep.subr.bf16.mxu0 0
    %2360 = vmatpush1.bf16.msra.mxu0 %v2332
    %2361 = vmatprep.subr.bf16.mxu0 0
    %2362 = vmatpush1.bf16.msra.mxu0 %v2331
    %2363 = vmatprep.subr.bf16.mxu0 0
    %2364 = vmatpush2.bf16.msra.mxu0 0
    %2365 = vmatprep.subr.bf16.mxu0 0
    %2366 = vmatpush2.bf16.msra.mxu0 0
    %2367 = vmatprep.subr.bf16.mxu0 0
    %2368 = vmatpush2.bf16.msra.mxu0 0
    %2369 = vmatprep.subr.bf16.mxu0 0
    %2370 = vmatpush2.bf16.msra.mxu0 0
    %2371 = vmatprep.subr.bf16.mxu0 0
    %2372 = vmatpush2.bf16.msra.mxu0 0
    %2373 = vmatprep.subr.bf16.mxu0 0
    %2374 = vmatpush2.bf16.msra.mxu0 0
    %2375 = vmatprep.subr.bf16.mxu0 0
    %2376 = vmatpush2.bf16.msra.mxu0 0
    %2377 = vmatprep.subr.bf16.mxu0 0
    %2378 = vmatpush2.bf16.msra.mxu0 0
    %2379 = vmatprep.mubr.bf16.mxu0 0
    %2380 = vmatmul.mubr.bf16.gmra.mxu0 %v1970
    %v2381 = vpop.f32.mrf.mxu0
    %v2382 = vadd.f32 %v2293, %v2381
    %v2383 = vpop.f32.mrf.mxu0
    %v2384 = vpop.f32.mrf.mxu0
    %v2385 = vadd.f32 %v2296, %v2384
    %v2386 = vpop.f32.mrf.mxu0
    %2387 = vdwg.mxu0
    %s2388 = scalar_lea.vmem [#allocation8], 704
    %v2389 = vld [vmem:[%s2388] sm:$0xf]
    %v2390 = vld [vmem:[%s2388 + $0x4] sm:$0xf]
    %v2391 = vld [vmem:[%s2388 + $0x8] sm:$0xf]
    %v2392 = vld [vmem:[%s2388 + $0xc] sm:$0xf]
    %v2393 = vld [vmem:[%s2388 + $0x10] sm:$0xf]
    %v2394 = vld [vmem:[%s2388 + $0x14] sm:$0xf]
    %v2395 = vld [vmem:[%s2388 + $0x18] sm:$0xf]
    %v2396 = vld [vmem:[%s2388 + $0x1c] sm:$0xf]
    %v2397 = vld [vmem:[%s2388 + $0x20] sm:$0xf]
    %v2398 = vld [vmem:[%s2388 + $0x24] sm:$0xf]
    %v2399 = vld [vmem:[%s2388 + $0x28] sm:$0xf]
    %v2400 = vld [vmem:[%s2388 + $0x2c] sm:$0xf]
    %v2401 = vld [vmem:[%s2388 + $0x30] sm:$0xf]
    %v2402 = vld [vmem:[%s2388 + $0x34] sm:$0xf]
    %v2403 = vld [vmem:[%s2388 + $0x38] sm:$0xf]
    %v2404 = vld [vmem:[%s2388 + $0x3c] sm:$0xf]
    %v2421 = vunpack.c.l.b16 %v2389
    %v2422 = vunpack.c.l.b16 %v2390
    %v2423 = vunpack.c.l.b16 %v2391
    %v2424 = vunpack.c.l.b16 %v2392
    %v2425 = vunpack.c.l.b16 %v2393
    %v2426 = vunpack.c.l.b16 %v2394
    %v2427 = vunpack.c.l.b16 %v2395
    %v2428 = vunpack.c.l.b16 %v2396
    %v2429 = vunpack.c.l.b16 %v2397
    %v2430 = vunpack.c.l.b16 %v2398
    %v2431 = vunpack.c.l.b16 %v2399
    %v2432 = vunpack.c.l.b16 %v2400
    %v2433 = vunpack.c.l.b16 %v2401
    %v2434 = vunpack.c.l.b16 %v2402
    %v2435 = vunpack.c.l.b16 %v2403
    %v2436 = vunpack.c.l.b16 %v2404
    %v2437 = vpack.c.b16 %v2422, %v2421
    %v2438 = vpack.c.b16 %v2424, %v2423
    %v2439 = vpack.c.b16 %v2426, %v2425
    %v2440 = vpack.c.b16 %v2428, %v2427
    %v2441 = vpack.c.b16 %v2430, %v2429
    %v2442 = vpack.c.b16 %v2432, %v2431
    %v2443 = vpack.c.b16 %v2434, %v2433
    %v2444 = vpack.c.b16 %v2436, %v2435
    %2453 = vmatprep.subr.bf16.mxu0 0
    %2454 = vmatpush1.bf16.msra.mxu0 %v2444
    %2455 = vmatprep.subr.bf16.mxu0 0
    %2456 = vmatpush1.bf16.msra.mxu0 %v2443
    %2457 = vmatprep.subr.bf16.mxu0 0
    %2458 = vmatpush1.bf16.msra.mxu0 %v2442
    %2459 = vmatprep.subr.bf16.mxu0 0
    %2460 = vmatpush1.bf16.msra.mxu0 %v2441
    %2461 = vmatprep.subr.bf16.mxu0 0
    %2462 = vmatpush1.bf16.msra.mxu0 %v2440
    %2463 = vmatprep.subr.bf16.mxu0 0
    %2464 = vmatpush1.bf16.msra.mxu0 %v2439
    %2465 = vmatprep.subr.bf16.mxu0 0
    %2466 = vmatpush1.bf16.msra.mxu0 %v2438
    %2467 = vmatprep.subr.bf16.mxu0 0
    %2468 = vmatpush1.bf16.msra.mxu0 %v2437
    %2469 = vmatprep.subr.bf16.mxu0 0
    %2470 = vmatpush2.bf16.msra.mxu0 0
    %2471 = vmatprep.subr.bf16.mxu0 0
    %2472 = vmatpush2.bf16.msra.mxu0 0
    %2473 = vmatprep.subr.bf16.mxu0 0
    %2474 = vmatpush2.bf16.msra.mxu0 0
    %2475 = vmatprep.subr.bf16.mxu0 0
    %2476 = vmatpush2.bf16.msra.mxu0 0
    %2477 = vmatprep.subr.bf16.mxu0 0
    %2478 = vmatpush2.bf16.msra.mxu0 0
    %2479 = vmatprep.subr.bf16.mxu0 0
    %2480 = vmatpush2.bf16.msra.mxu0 0
    %2481 = vmatprep.subr.bf16.mxu0 0
    %2482 = vmatpush2.bf16.msra.mxu0 0
    %2483 = vmatprep.subr.bf16.mxu0 0
    %2484 = vmatpush2.bf16.msra.mxu0 0
    %2485 = vmatprep.mubr.bf16.mxu0 0
    %2486 = vmatmul.mubr.bf16.gmra.mxu0 %v366
    %v2487 = vpop.f32.mrf.mxu0
    %v2488 = vadd.f32 0.0, %v2487
    %v2489 = vpop.f32.mrf.mxu0
    %v2490 = vpop.f32.mrf.mxu0
    %v2491 = vadd.f32 0.0, %v2490
    %v2492 = vpop.f32.mrf.mxu0
    %2493 = vdwg.mxu0
    %v2494 = vadd.f32 %v2382, %v2488
    %v2495 = vadd.f32 %v2385, %v2491
    %v2496 = vld [vmem:[%s6 + $0x8] sm:$0x1]
    %v2497 = vlaneseq
    %v2498 = vshrl.u32 %v2497, 7
    %v2499 = vsub.s32 0, %v2498
    %v2500 = vrot.slane %v2496, %v2499
    %v2501 = vadd.f32 %v2494, %v2500
    %v2502 = vadd.f32 %v2495, %v2500
    %v2503 = vxor.u32 %v2501, 2147483648
    %v2504 = vxor.u32 %v2502, 2147483648
    %v2505 = vmul.f32 %v2503, 1.442695
    %v2506 = vpow.pop %v2505
    %v2507 = vmul.f32 %v2504, 1.442695
    %v2508 = vpow.pop %v2507
    %v2509 = vadd.f32 %v2506, 1.0
    %v2510 = vadd.f32 %v2508, 1.0
    %v2511 = vrcp.pop %v2509
    %v2512 = vmul.f32 1.0, %v2511
    %v2513 = vrcp.pop %v2510
    %v2514 = vmul.f32 1.0, %v2513
    %2515 = vrot.lane.b32.xlu0 %v2501, 96
    %v2516 = vpop.permute.xlu0 %2515
    %2517 = vrot.lane.b32.xlu0 %v2502, 96
    %v2518 = vpop.permute.xlu0 %2517
    %v2519 = vxor.u32 %v2516, 2147483648
    %v2520 = vxor.u32 %v2518, 2147483648
    %v2521 = vmul.f32 %v2519, 1.442695
    %v2522 = vpow.pop %v2521
    %v2523 = vmul.f32 %v2520, 1.442695
    %v2524 = vpow.pop %v2523
    %v2525 = vadd.f32 %v2522, 1.0
    %v2526 = vadd.f32 %v2524, 1.0
    %v2527 = vrcp.pop %v2525
    %v2528 = vmul.f32 1.0, %v2527
    %v2529 = vrcp.pop %v2526
    %v2530 = vmul.f32 1.0, %v2529
    %2531 = vrot.lane.b32.xlu0 %v2501, 64
    %v2532 = vpop.permute.xlu0 %2531
    %2533 = vrot.lane.b32.xlu0 %v2502, 64
    %v2534 = vpop.permute.xlu0 %2533
    %v2535 = vld [vmem:[%s6 + $0x9] sm:$0x1]
    %v2536 = vlaneseq
    %v2537 = vshrl.u32 %v2536, 7
    %v2538 = vsub.s32 0, %v2537
    %v2539 = vrot.slane %v2535, %v2538
    %v2540 = vmul.f32 %v2512, %v2539
    %v2541 = vmul.f32 %v2514, %v2539
    %v2542 = vadd.f32 %v2532, %v2540
    %v2543 = vadd.f32 %v2534, %v2541
    %v2544 = vtanh.pop %v2542
    %v2545 = vtanh.pop %v2543
    %v2546 = vsub.f32 1.0, %v2528
    %v2547 = vsub.f32 1.0, %v2530
    %v2548 = vmul.f32 %v2546, %v2544
    %v2549 = vmul.f32 %v2547, %v2545
    %v2550 = vmul.f32 %v2548, %v90
    %v2551 = vmul.f32 %v2549, %v90
    %v2552 = vadd.f32 %v2174, %v2550
    %v2553 = vadd.f32 %v2175, %v2551
    %v2554 = vpack.c.bf16 %v2553, %v2552
    %s2555 = scalar_lea.vmem [#allocation8], 768
    %v2556 = vld [vmem:[%s2555] sm:$0xf]
    %v2557 = vld [vmem:[%s2555 + $0x4] sm:$0xf]
    %v2558 = vld [vmem:[%s2555 + $0x8] sm:$0xf]
    %v2559 = vld [vmem:[%s2555 + $0xc] sm:$0xf]
    %v2560 = vld [vmem:[%s2555 + $0x10] sm:$0xf]
    %v2561 = vld [vmem:[%s2555 + $0x14] sm:$0xf]
    %v2562 = vld [vmem:[%s2555 + $0x18] sm:$0xf]
    %v2563 = vld [vmem:[%s2555 + $0x1c] sm:$0xf]
    %v2564 = vld [vmem:[%s2555 + $0x20] sm:$0xf]
    %v2565 = vld [vmem:[%s2555 + $0x24] sm:$0xf]
    %v2566 = vld [vmem:[%s2555 + $0x28] sm:$0xf]
    %v2567 = vld [vmem:[%s2555 + $0x2c] sm:$0xf]
    %v2568 = vld [vmem:[%s2555 + $0x30] sm:$0xf]
    %v2569 = vld [vmem:[%s2555 + $0x34] sm:$0xf]
    %v2570 = vld [vmem:[%s2555 + $0x38] sm:$0xf]
    %v2571 = vld [vmem:[%s2555 + $0x3c] sm:$0xf]
    %v2572 = vld [vmem:[%s6 + $0xa] sm:$0x1]
    %v2573 = vlaneseq
    %v2574 = vshrl.u32 %v2573, 7
    %v2575 = vsub.s32 0, %v2574
    %v2576 = vrot.slane %v2572, %v2575
    %v2593 = vunpack.c.l.b16 %v2556
    %v2594 = vunpack.c.l.b16 %v2557
    %v2595 = vunpack.c.l.b16 %v2558
    %v2596 = vunpack.c.l.b16 %v2559
    %v2597 = vunpack.c.l.b16 %v2560
    %v2598 = vunpack.c.l.b16 %v2561
    %v2599 = vunpack.c.l.b16 %v2562
    %v2600 = vunpack.c.l.b16 %v2563
    %v2601 = vunpack.c.l.b16 %v2564
    %v2602 = vunpack.c.l.b16 %v2565
    %v2603 = vunpack.c.l.b16 %v2566
    %v2604 = vunpack.c.l.b16 %v2567
    %v2605 = vunpack.c.l.b16 %v2568
    %v2606 = vunpack.c.l.b16 %v2569
    %v2607 = vunpack.c.l.b16 %v2570
    %v2608 = vunpack.c.l.b16 %v2571
    %v2609 = vpack.c.b16 %v2594, %v2593
    %v2610 = vpack.c.b16 %v2596, %v2595
    %v2611 = vpack.c.b16 %v2598, %v2597
    %v2612 = vpack.c.b16 %v2600, %v2599
    %v2613 = vpack.c.b16 %v2602, %v2601
    %v2614 = vpack.c.b16 %v2604, %v2603
    %v2615 = vpack.c.b16 %v2606, %v2605
    %v2616 = vpack.c.b16 %v2608, %v2607
    %2625 = vmatprep.subr.bf16.mxu0 0
    %2626 = vmatpush1.bf16.msra.mxu0 %v2616
    %2627 = vmatprep.subr.bf16.mxu0 0
    %2628 = vmatpush1.bf16.msra.mxu0 %v2615
    %2629 = vmatprep.subr.bf16.mxu0 0
    %2630 = vmatpush1.bf16.msra.mxu0 %v2614
    %2631 = vmatprep.subr.bf16.mxu0 0
    %2632 = vmatpush1.bf16.msra.mxu0 %v2613
    %2633 = vmatprep.subr.bf16.mxu0 0
    %2634 = vmatpush1.bf16.msra.mxu0 %v2612
    %2635 = vmatprep.subr.bf16.mxu0 0
    %2636 = vmatpush1.bf16.msra.mxu0 %v2611
    %2637 = vmatprep.subr.bf16.mxu0 0
    %2638 = vmatpush1.bf16.msra.mxu0 %v2610
    %2639 = vmatprep.subr.bf16.mxu0 0
    %2640 = vmatpush1.bf16.msra.mxu0 %v2609
    %2641 = vmatprep.subr.bf16.mxu0 0
    %2642 = vmatpush2.bf16.msra.mxu0 0
    %2643 = vmatprep.subr.bf16.mxu0 0
    %2644 = vmatpush2.bf16.msra.mxu0 0
    %2645 = vmatprep.subr.bf16.mxu0 0
    %2646 = vmatpush2.bf16.msra.mxu0 0
    %2647 = vmatprep.subr.bf16.mxu0 0
    %2648 = vmatpush2.bf16.msra.mxu0 0
    %2649 = vmatprep.subr.bf16.mxu0 0
    %2650 = vmatpush2.bf16.msra.mxu0 0
    %2651 = vmatprep.subr.bf16.mxu0 0
    %2652 = vmatpush2.bf16.msra.mxu0 0
    %2653 = vmatprep.subr.bf16.mxu0 0
    %2654 = vmatpush2.bf16.msra.mxu0 0
    %2655 = vmatprep.subr.bf16.mxu0 0
    %2656 = vmatpush2.bf16.msra.mxu0 0
    %2657 = vmatprep.mubr.bf16.mxu0 0
    %2658 = vmatmul.mubr.bf16.gmra.mxu0 %v2554
    %v2659 = vpop.f32.mrf.mxu0
    %v2660 = vadd.f32 %v2576, %v2659
    %v2661 = vpop.f32.mrf.mxu0
    %v2662 = vpop.f32.mrf.mxu0
    %v2663 = vadd.f32 %v2576, %v2662
    %v2664 = vpop.f32.mrf.mxu0
    %2665 = vdwg.mxu0
    %v2666 = vxor.u32 %v2660, 2147483648
    %v2667 = vxor.u32 %v2663, 2147483648
    %v2668 = vmul.f32 %v2666, 1.442695
    %v2669 = vpow.pop %v2668
    %v2670 = vmul.f32 %v2667, 1.442695
    %v2671 = vpow.pop %v2670
    %v2672 = vadd.f32 %v2669, 1.0
    %v2673 = vadd.f32 %v2671, 1.0
    %v2674 = vrcp.pop %v2672
    %v2675 = vmul.f32 1.0, %v2674
    %v2676 = vrcp.pop %v2673
    %v2677 = vmul.f32 1.0, %v2676
    %2678 = vrot.lane.b32.xlu0 %v2660, 96
    %v2679 = vpop.permute.xlu0 %2678
    %2680 = vrot.lane.b32.xlu0 %v2663, 96
    %v2681 = vpop.permute.xlu0 %2680
    %v2682 = vxor.u32 %v2679, 2147483648
    %v2683 = vxor.u32 %v2681, 2147483648
    %v2684 = vmul.f32 %v2682, 1.442695
    %v2685 = vpow.pop %v2684
    %v2686 = vmul.f32 %v2683, 1.442695
    %v2687 = vpow.pop %v2686
    %v2688 = vadd.f32 %v2685, 1.0
    %v2689 = vadd.f32 %v2687, 1.0
    %v2690 = vrcp.pop %v2688
    %v2691 = vmul.f32 1.0, %v2690
    %v2692 = vrcp.pop %v2689
    %v2693 = vmul.f32 1.0, %v2692
    %2694 = vrot.lane.b32.xlu0 %v2660, 64
    %v2695 = vpop.permute.xlu0 %2694
    %2696 = vrot.lane.b32.xlu0 %v2663, 64
    %v2697 = vpop.permute.xlu0 %2696
    %v2698 = vld [vmem:[%s6 + $0xb] sm:$0x1]
    %v2699 = vlaneseq
    %v2700 = vshrl.u32 %v2699, 7
    %v2701 = vsub.s32 0, %v2700
    %v2702 = vrot.slane %v2698, %v2701
    %v2703 = vmul.f32 %v2675, %v2702
    %v2704 = vmul.f32 %v2677, %v2702
    %v2705 = vadd.f32 %v2695, %v2703
    %v2706 = vadd.f32 %v2697, %v2704
    %v2707 = vtanh.pop %v2705
    %v2708 = vtanh.pop %v2706
    %v2709 = vsub.f32 1.0, %v2691
    %v2710 = vsub.f32 1.0, %v2693
    %v2711 = vmul.f32 %v2709, %v2707
    %v2712 = vmul.f32 %v2710, %v2708
    %v2713 = vmul.f32 %v2711, %v90
    %v2714 = vmul.f32 %v2712, %v90
    %v2715 = vadd.f32 %v2552, %v2713
    %v2716 = vadd.f32 %v2553, %v2714
    %v2717 = vpack.c.bf16 %v2716, %v2715
    %s2718 = scalar_lea.vmem [#allocation8], 192
    %v2719 = vld [vmem:[%s2718] sm:$0xf]
    %v2720 = vld [vmem:[%s2718 + $0x4] sm:$0xf]
    %v2721 = vld [vmem:[%s2718 + $0x8] sm:$0xf]
    %v2722 = vld [vmem:[%s2718 + $0xc] sm:$0xf]
    %v2723 = vld [vmem:[%s2718 + $0x10] sm:$0xf]
    %v2724 = vld [vmem:[%s2718 + $0x14] sm:$0xf]
    %v2725 = vld [vmem:[%s2718 + $0x18] sm:$0xf]
    %v2726 = vld [vmem:[%s2718 + $0x1c] sm:$0xf]
    %v2727 = vld [vmem:[%s2718 + $0x20] sm:$0xf]
    %v2728 = vld [vmem:[%s2718 + $0x24] sm:$0xf]
    %v2729 = vld [vmem:[%s2718 + $0x28] sm:$0xf]
    %v2730 = vld [vmem:[%s2718 + $0x2c] sm:$0xf]
    %v2731 = vld [vmem:[%s2718 + $0x30] sm:$0xf]
    %v2732 = vld [vmem:[%s2718 + $0x34] sm:$0xf]
    %v2733 = vld [vmem:[%s2718 + $0x38] sm:$0xf]
    %v2734 = vld [vmem:[%s2718 + $0x3c] sm:$0xf]
    %v2735 = vld [vmem:[%s6 + $0x3] sm:$0x1]
    %v2736 = vlaneseq
    %v2737 = vshrl.u32 %v2736, 7
    %v2738 = vsub.s32 0, %v2737
    %v2739 = vrot.slane %v2735, %v2738
    %v2756 = vunpack.c.l.b16 %v2719
    %v2757 = vunpack.c.l.b16 %v2720
    %v2758 = vunpack.c.l.b16 %v2721
    %v2759 = vunpack.c.l.b16 %v2722
    %v2760 = vunpack.c.l.b16 %v2723
    %v2761 = vunpack.c.l.b16 %v2724
    %v2762 = vunpack.c.l.b16 %v2725
    %v2763 = vunpack.c.l.b16 %v2726
    %v2764 = vunpack.c.l.b16 %v2727
    %v2765 = vunpack.c.l.b16 %v2728
    %v2766 = vunpack.c.l.b16 %v2729
    %v2767 = vunpack.c.l.b16 %v2730
    %v2768 = vunpack.c.l.b16 %v2731
    %v2769 = vunpack.c.l.b16 %v2732
    %v2770 = vunpack.c.l.b16 %v2733
    %v2771 = vunpack.c.l.b16 %v2734
    %v2772 = vpack.c.b16 %v2757, %v2756
    %v2773 = vpack.c.b16 %v2759, %v2758
    %v2774 = vpack.c.b16 %v2761, %v2760
    %v2775 = vpack.c.b16 %v2763, %v2762
    %v2776 = vpack.c.b16 %v2765, %v2764
    %v2777 = vpack.c.b16 %v2767, %v2766
    %v2778 = vpack.c.b16 %v2769, %v2768
    %v2779 = vpack.c.b16 %v2771, %v2770
    %2788 = vmatprep.subr.bf16.mxu0 0
    %2789 = vmatpush1.bf16.msra.mxu0 %v2779
    %2790 = vmatprep.subr.bf16.mxu0 0
    %2791 = vmatpush1.bf16.msra.mxu0 %v2778
    %2792 = vmatprep.subr.bf16.mxu0 0
    %2793 = vmatpush1.bf16.msra.mxu0 %v2777
    %2794 = vmatprep.subr.bf16.mxu0 0
    %2795 = vmatpush1.bf16.msra.mxu0 %v2776
    %2796 = vmatprep.subr.bf16.mxu0 0
    %2797 = vmatpush1.bf16.msra.mxu0 %v2775
    %2798 = vmatprep.subr.bf16.mxu0 0
    %2799 = vmatpush1.bf16.msra.mxu0 %v2774
    %2800 = vmatprep.subr.bf16.mxu0 0
    %2801 = vmatpush1.bf16.msra.mxu0 %v2773
    %2802 = vmatprep.subr.bf16.mxu0 0
    %2803 = vmatpush1.bf16.msra.mxu0 %v2772
    %2804 = vmatprep.subr.bf16.mxu0 0
    %2805 = vmatpush2.bf16.msra.mxu0 0
    %2806 = vmatprep.subr.bf16.mxu0 0
    %2807 = vmatpush2.bf16.msra.mxu0 0
    %2808 = vmatprep.subr.bf16.mxu0 0
    %2809 = vmatpush2.bf16.msra.mxu0 0
    %2810 = vmatprep.subr.bf16.mxu0 0
    %2811 = vmatpush2.bf16.msra.mxu0 0
    %2812 = vmatprep.subr.bf16.mxu0 0
    %2813 = vmatpush2.bf16.msra.mxu0 0
    %2814 = vmatprep.subr.bf16.mxu0 0
    %2815 = vmatpush2.bf16.msra.mxu0 0
    %2816 = vmatprep.subr.bf16.mxu0 0
    %2817 = vmatpush2.bf16.msra.mxu0 0
    %2818 = vmatprep.subr.bf16.mxu0 0
    %2819 = vmatpush2.bf16.msra.mxu0 0
    %2820 = vmatprep.mubr.bf16.mxu0 0
    %2821 = vmatmul.mubr.bf16.gmra.mxu0 %v2717
    %v2822 = vpop.f32.mrf.mxu0
    %v2823 = vadd.f32 %v2739, %v2822
    %v2824 = vpop.f32.mrf.mxu0
    %v2825 = vpop.f32.mrf.mxu0
    %v2826 = vadd.f32 %v2739, %v2825
    %v2827 = vpop.f32.mrf.mxu0
    %2828 = vdwg.mxu0
    %2829 = vst [vmem:[#allocation10] sm:$0xff] %v2823
    %2830 = vst [vmem:[#allocation10 + $0x8] sm:$0xff] %v2826
    // Predicated region
    $region46: #{tpu_custom_call.1} parent=1 // pred_check
      _
    $region47: #{tpu_custom_call.1} parent=1 // pred_check_branch
      %2832 = sbr.rel (0) target = $region49
    $region48: #{tpu_custom_call.1} parent=1 // pred_region
      %s2834 = ssub.s32 256, 256
      %2835 = vsyncadd [#allocation4], %s2834
      %s2836 = sshll.u32 [#allocation10], 4
      %s2837 = int_to_ptr.vmem [resolvable:$true] %s2836
      %2842 = dma.vmem_to_hbm [thread:$0]  %s2837, 256, %s7, [#allocation4], 128, 128, 8
    $region49: #{tpu_custom_call.1} parent=1 // pred_fallthru
      _
    // Predicated region
    $region50: #{tpu_custom_call.1} parent=1 // pred_check
      _
    $region51: #{tpu_custom_call.1} parent=1 // pred_check_branch
      %2844 = sbr.rel (0) target = $region53
    $region52: #{tpu_custom_call.1} parent=1 // pred_region
      %s2846 = ssub.s32 256, 256
      %2847 = vsyncadd [#allocation12], %s2846
      %s2848 = sshll.u32 [#allocation11], 4
      %s2849 = int_to_ptr.vmem [resolvable:$true] %s2848
      %2854 = dma.vmem_to_hbm [thread:$0]  %s2849, 256, %s8, [#allocation12], 128, 128, 8
    $region53: #{tpu_custom_call.1} parent=1 // pred_fallthru
      _
    // Predicated region
    $region54: #{tpu_custom_call.1} parent=1 // pred_check
      _
    $region55: #{tpu_custom_call.1} parent=1 // pred_check_branch
      %2856 = sbr.rel (0) target = $region57
    $region56: #{tpu_custom_call.1} parent=1 // pred_region
      %2857 = dma.done [#allocation4], 256
    $region57: #{tpu_custom_call.1} parent=1 // pred_fallthru
      _
    // Predicated region
    $region58: #{tpu_custom_call.1} parent=1 // pred_check
      _
    $region59: #{tpu_custom_call.1} parent=1 // pred_check_branch
      %2859 = sbr.rel (0) target = $region61
    $region60: #{tpu_custom_call.1} parent=1 // pred_region
      %2860 = dma.done [#allocation12], 256
    $region61: #{tpu_custom_call.1} parent=1 // pred_fallthru
      _
    %2861 = vsyncpa [#allocation3], 1
    %2862 = vsyncpa [#allocation6], 1
    %2863 = vsyncpa [#allocation9], 1
    %2864 = vsyncpa [#allocation4], 1
    %2865 = vsyncpa [#allocation12], 1

</llo_original>
